<compile_context>
chip_gen: v5e
topology: v5e:2x2
jax: 0.10.0
libtpu: 0.0.40
codegen_flags: <defaults>
</compile_context>

<pallas_src>
import functools
import math

import jax
import jax.numpy as jnp
from jax.experimental import pallas as pl
from jax.experimental.pallas import tpu as pltpu


# ----------------------------------------------------------------------------
# Generation-aware sizing helpers.
# ----------------------------------------------------------------------------
@functools.lru_cache(maxsize=None)
def _vmem_capacity_bytes():
    try:
        return int(pltpu.get_tpu_info().vmem_capacity_bytes)
    except Exception:
        return 64 * 1024 * 1024  # conservative (v7x-sized) fallback


def _vmem_limit_bytes():
    # Leave ~25% headroom for Mosaic internal scratch / pipeline overshoot:
    # ~48 MiB on v7x (64 MiB physical VMEM), ~96 MiB on v5e/v6e (128 MiB).
    return (_vmem_capacity_bytes() * 3) // 4


def _default_token_tile():
    # Bigger tiles amortize the ~0.35us per-grid-step overhead where VMEM has
    # room (v5e/v6e, 128 MiB); keep them moderate on v7x's 64 MiB VMEM.
    return 512 if _vmem_capacity_bytes() >= 100 * 1024 * 1024 else 256


def _round_up(n, m):
    return -(-n // m) * m


def _choose_k_tile(e, k_tile=512):
    """Contraction tile over the embed dim: must be a multiple of 128 (it is
    the lane dim of the activation block) and divide E exactly."""
    if e <= k_tile or e % 128 != 0:
        return e
    for cand in range(k_tile, 0, -128):
        if e % cand == 0:
            return cand
    return e


def _pad_axis(a, axis, new_size):
    pad = [(0, 0)] * a.ndim
    pad[axis] = (0, new_size - a.shape[axis])
    return jnp.pad(a, pad)


# ----------------------------------------------------------------------------
# Kernel A: fused QKV projection (K-tiled, f32 accumulation) + per-token
# "across heads" attention computed on the VPU in the lane-dense (tokens, E)
# layout (no (t, h, d) relayout).  Output is written head-major (B, H, S, D).
# ----------------------------------------------------------------------------
def _qkv_attn_kernel(x_ref, wqkv_ref, bqkv_ref, o_ref, acc_ref, *,
                     num_heads, head_dim):
    H, D = num_heads, head_dim
    E = H * D
    ki = pl.program_id(2)

    @pl.when(ki == 0)
    def _init():
        acc_ref[...] = jnp.zeros_like(acc_ref)

    # Streamed projection: acc += x_tile @ wqkv_tile  (MXU, f32 accumulation).
    acc_ref[...] += jnp.dot(x_ref[0], wqkv_ref[...],
                            preferred_element_type=jnp.float32)

    @pl.when(ki == pl.num_programs(2) - 1)
    def _finalize():
        qkv = acc_ref[...] + bqkv_ref[...].astype(jnp.float32)  # (ts, 3E) f32
        q = qkv[:, 0 * E:1 * E]          # lane-dense slices; no relayout
        k = qkv[:, 1 * E:2 * E]
        v = qkv[:, 2 * E:3 * E]

        scale = 1.0 / math.sqrt(D)
        k_sl = [k[:, j * D:(j + 1) * D] for j in range(H)]   # (ts, D) each
        v_sl = [v[:, j * D:(j + 1) * D] for j in range(H)]

        # TODO(synk): attn_mask (optional arg, default None) is not supported.
        outs = []
        for h in range(H):               # static unroll; H is small
            qh = q[:, h * D:(h + 1) * D]                       # (ts, D)
            # Scores over key heads: s[:, j] = sum_d qh * k_j  (VPU mul + reduce)
            s = jnp.concatenate(
                [jnp.sum(qh * k_sl[j], axis=-1, keepdims=True)
                 for j in range(H)],
                axis=-1) * scale                               # (ts, H) f32
            # Softmax over key heads, kept in f32 (v5e has no bf16 VPU/EUP).
            m = jnp.max(s, axis=-1, keepdims=True)
            p = jnp.exp(s - m)
            inv = pl.reciprocal(jnp.sum(p, axis=-1, keepdims=True), approx=False)
            p = p * inv
            # PV: o_h = sum_j p[:, j] * v_j  (lane-broadcast multiply-add).
            o_h = p[:, 0:1] * v_sl[0]
            for j in range(1, H):
                o_h = o_h + p[:, j:j + 1] * v_sl[j]
            outs.append(o_h)                                   # (ts, D)

        # Head-major result, single store.  The HBM output is therefore already
        # torch's transpose(1, 2) permutation; the host reshape to (B*S, E) is
        # a free row-major reinterpretation.
        # TODO(synk): for D < 128 these stores are lane-masked; a lane-dense
        # alternative would require a real transpose elsewhere.
        o_ref[0] = jnp.stack(outs, axis=0).astype(o_ref.dtype)  # (H, ts, D)


# ----------------------------------------------------------------------------
# Kernel B: out_proj linear layer  o = x @ W + b, K-tiled over input features.
# ----------------------------------------------------------------------------
def _linear_kernel(x_ref, w_ref, b_ref, o_ref, acc_ref):
    ki = pl.program_id(1)

    @pl.when(ki == 0)
    def _init():
        acc_ref[...] = jnp.zeros_like(acc_ref)

    acc_ref[...] += jnp.dot(x_ref[...], w_ref[...],
                            preferred_element_type=jnp.float32)

    @pl.when(ki == pl.num_programs(1) - 1)
    def _finalize():
        o_ref[...] = (acc_ref[...]
                      + b_ref[...].astype(jnp.float32)).astype(o_ref.dtype)


# ----------------------------------------------------------------------------
# Wrappers
# ----------------------------------------------------------------------------
def qkv_attention(x, wqkv, bqkv, *, num_heads, head_dim, seq_tile=None,
                  k_tile=512):
    """Fused QKV + across-head attention; returns the permuted (B, H, S, D)."""
    B, S, E = x.shape
    H, D = num_heads, head_dim
    if seq_tile is None:
        seq_tile = _default_token_tile()

    # Sequence tile: multiple of 8 (sublanes) or the full (short) sequence.
    # With B == 1, try to make >=2 sequence tiles so both v7x TCs get work.
    if S <= 8:
        ts = S
    elif B >= 2:
        ts = min(seq_tile, _round_up(S, 8))
    else:
        ts = min(seq_tile, max(8, _round_up(-(-S // 2), 8)))
    s_pad = _round_up(S, ts)
    if s_pad != S:
        # TODO(synk): handle ragged tails with in-kernel masked stores instead
        # of host pad + slice (softmax is per-token, so padding is safe).
        x = _pad_axis(x, 1, s_pad)

    tk = _choose_k_tile(E, k_tile)
    num_k = E // tk
    w_pm = pl.Buffered(1) if num_k == 1 else pl.Buffered(2)

    kernel = functools.partial(_qkv_attn_kernel, num_heads=H, head_dim=D)
    out = pl.pallas_call(
        kernel,
        out_shape=jax.ShapeDtypeStruct((B, H, s_pad, D), x.dtype),
        grid_spec=pltpu.PrefetchScalarGridSpec(
            num_scalar_prefetch=0,
            grid=(B, s_pad // ts, num_k),                 # reduction axis last
            in_specs=[
                pl.BlockSpec((1, ts, tk), lambda b, si, ki: (b, si, ki)),
                # Streamed weight (double-buffered) when K-tiled; resident and
                # single-buffered when the whole fused weight fits.
                pl.BlockSpec((tk, 3 * E), lambda b, si, ki: (ki, 0),
                             pipeline_mode=w_pm),
                pl.BlockSpec((1, 3 * E), lambda b, si, ki: (0, 0),
                             pipeline_mode=pl.Buffered(1)),
            ],
            # Head-major output block: absorbs torch's transpose(1, 2), so no
            # standalone XLA transpose / extra activation HBM round trip.
            out_specs=pl.BlockSpec((1, H, ts, D),
                                   lambda b, si, ki: (b, 0, si, 0)),
            scratch_shapes=[pltpu.VMEM((ts, 3 * E), jnp.float32)],
        ),
        compiler_params=pltpu.CompilerParams(
            dimension_semantics=("parallel", "parallel", "arbitrary"),
            vmem_limit_bytes=_vmem_limit_bytes()),
    )(x, wqkv, bqkv)

    if s_pad != S:
        out = out[:, :, :S, :]           # slice BEFORE the (B*S, E) reshape
    return out


def out_proj(x2d, w, b, *, block_tokens=None, k_tile=512):
    n_tok, e_in = x2d.shape
    e_out = w.shape[1]
    if block_tokens is None:
        block_tokens = _default_token_tile()

    if n_tok >= 2 * block_tokens:
        tm = block_tokens
    else:
        # Keep >=2 grid steps when possible so both v7x TensorCores get work.
        tm = min(n_tok, max(8, _round_up(-(-n_tok // 2), 8)))
    n_pad = _round_up(n_tok, tm)
    if n_pad != n_tok:
        x2d = _pad_axis(x2d, 0, n_pad)

    tk = _choose_k_tile(e_in, k_tile)
    num_k = e_in // tk
    w_pm = pl.Buffered(1) if num_k == 1 else pl.Buffered(2)

    out = pl.pallas_call(
        _linear_kernel,
        out_shape=jax.ShapeDtypeStruct((n_pad, e_out), x2d.dtype),
        grid_spec=pltpu.PrefetchScalarGridSpec(
            num_scalar_prefetch=0,
            grid=(n_pad // tm, num_k),
            in_specs=[
                pl.BlockSpec((tm, tk), lambda i, ki: (i, ki)),
                pl.BlockSpec((tk, e_out), lambda i, ki: (ki, 0),
                             pipeline_mode=w_pm),
                pl.BlockSpec((1, e_out), lambda i, ki: (0, 0),
                             pipeline_mode=pl.Buffered(1)),
            ],
            out_specs=pl.BlockSpec((tm, e_out), lambda i, ki: (i, 0)),
            scratch_shapes=[pltpu.VMEM((tm, e_out), jnp.float32)],
        ),
        compiler_params=pltpu.CompilerParams(
            dimension_semantics=("parallel", "arbitrary"),
            vmem_limit_bytes=_vmem_limit_bytes()),
    )(x2d, w, b)
    return out[:n_tok] if n_pad != n_tok else out


def vanilla_attention_forward(x, params, *, num_heads, seq_tile=None,
                              block_tokens=None, compute_dtype=None):
    """Pallas implementation of VanillaAttention.forward(x, attn_mask=None)."""
    B, S, E = x.shape
    H = num_heads
    assert E % H == 0, "embed_dim must be divisible by num_heads"
    D = E // H

    wqkv, bqkv = params["wqkv"], params["bqkv"]
    wo, bo = params["wo"], params["bo"]
    if compute_dtype is not None:
        # bf16 operands -> ~2x MXU throughput on v6e/v7x, half the HBM/VMEM
        # bytes; MXU accumulation and softmax stay f32 inside the kernels.
        x = x.astype(compute_dtype)
        wqkv, bqkv = wqkv.astype(compute_dtype), bqkv.astype(compute_dtype)
        wo, bo = wo.astype(compute_dtype), bo.astype(compute_dtype)

    attn_bhsd = qkv_attention(x, wqkv, bqkv, num_heads=H, head_dim=D,
                              seq_tile=seq_tile)

    # (B, H, S, D) row-major == torch's transpose(1, 2).contiguous(); reshaping
    # to (B*S, E) is a pure row-major reinterpretation (no data movement).
    attn2d = attn_bhsd.reshape(B * S, E)
    out2d = out_proj(attn2d, wo, bo, block_tokens=block_tokens)
    return out2d.reshape(B, S, E)


# ----------------------------------------------------------------------------
# Pure-JAX reference (mirrors the PyTorch forward exactly), for verification.
# ----------------------------------------------------------------------------
def reference_forward(x, params, *, num_heads):
    B, S, E = x.shape
    H = num_heads
    D = E // H
    q = x @ params["wq"] + params["bq"][0]
    k = x @ params["wk"] + params["bk"][0]
    v = x @ params["wv"] + params["bv"][0]
    q = q.reshape(B, S, H, D)
    k = k.reshape(B, S, H, D)
    v = v.reshape(B, S, H, D)
    scores = jnp.einsum("bshd,bskd->bshk", q, k) / math.sqrt(D)
    probs = jax.nn.softmax(scores, axis=-1)
    out = jnp.einsum("bshk,bskd->bshd", probs, v)
    out = out.transpose(0, 2, 1, 3).reshape(B, S, E)
    return out @ params["wo"] + params["bo"][0]


def init_params(key, embed_dim):
    """nn.Linear-style init U(-1/sqrt(in), 1/sqrt(in)); weights pre-transposed
    to (in_features, out_features).  The fused QKV weight/bias are built ONCE
    here (not per forward pass)."""
    E = embed_dim
    bound = 1.0 / math.sqrt(E)
    keys = jax.random.split(key, 8)

    def u(k, shape):
        return jax.random.uniform(k, shape, jnp.float32, -bound, bound)

    p = {
        "wq": u(keys[0], (E, E)), "bq": u(keys[1], (1, E)),
        "wk": u(keys[2], (E, E)), "bk": u(keys[3], (1, E)),
        "wv": u(keys[4], (E, E)), "bv": u(keys[5], (1, E)),
        "wo": u(keys[6], (E, E)), "bo": u(keys[7], (1, E)),
    }
    p["wqkv"] = jnp.concatenate([p["wq"], p["wk"], p["wv"]], axis=1)
    p["bqkv"] = jnp.concatenate([p["bq"], p["bk"], p["bv"]], axis=1)
    return p


if __name__ == "__main__":
    B, S, E, H = 2, 8, 32, 4  # batch, seq, embed_dim, num_heads (head_dim = 8)

    key = jax.random.PRNGKey(0)
    k_x, k_p = jax.random.split(key)
    x = jax.random.normal(k_x, (B, S, E), dtype=jnp.float32)
    params = init_params(k_p, E)

    fwd = jax.jit(functools.partial(vanilla_attention_forward, num_heads=H))
    out = jax.block_until_ready(fwd(x, params))

    ref = reference_forward(x, params, num_heads=H)
    assert out.shape == (B, S, E)
    assert jnp.allclose(out, ref, atol=2e-3, rtol=2e-3), "f32 mismatch vs reference"

    # bf16 operand path (f32 accumulation + f32 softmax inside the kernels).
    fwd_bf16 = jax.jit(functools.partial(vanilla_attention_forward,
                                         num_heads=H,
                                         compute_dtype=jnp.bfloat16))
    out_bf16 = jax.block_until_ready(fwd_bf16(x, params))
    assert out_bf16.shape == (B, S, E)
    assert jnp.allclose(out_bf16.astype(jnp.float32), ref, atol=1e-1, rtol=1e-1), \
        "bf16 mismatch vs reference"

    print("KERNEL_OK")
</pallas_src>

<mosaic_0001>
module attributes {stable_mosaic.version = 11 : i64} {
  func.func @_linear_kernel(%arg0: i32, %arg1: i32, %arg2: memref<8x32xf32, #tpu.memory_space<vmem>>, %arg3: memref<32x32xf32, #tpu.memory_space<vmem>>, %arg4: memref<1x32xf32, #tpu.memory_space<vmem>>, %arg5: memref<8x32xf32, #tpu.memory_space<vmem>>, %arg6: memref<8x32xf32, #tpu.memory_space<vmem>>) attributes {dimension_semantics = [#tpu.dimension_semantics<parallel>, #tpu.dimension_semantics<arbitrary>], iteration_bounds = array<i64: 2, 1>, scalar_prefetch = 0 : i64, scratch_operands = 1 : i64, tpu.core_type = #tpu.core_type<tc>, window_params = [{transform_indices = @transform_0, window_bounds = array<i64: 8, 32>}, {pipeline_mode = #tpu.pipeline_mode<synchronous>, transform_indices = @transform_1, window_bounds = array<i64: 32, 32>}, {pipeline_mode = #tpu.pipeline_mode<synchronous>, transform_indices = @transform_2, window_bounds = array<i64: 1, 32>}, {transform_indices = @transform_3, window_bounds = array<i64: 8, 32>}]} {
    %c0_i32 = arith.constant 0 : i32
    %0 = arith.cmpi eq, %arg1, %c0_i32 : i32
    %1 = arith.extui %0 : i1 to i32
    %c0_i32_0 = arith.constant 0 : i32
    %2 = arith.cmpi ne, %1, %c0_i32_0 : i32
    scf.if %2 {
      %cst_10 = arith.constant 0.000000e+00 : f32
      %12 = vector.broadcast %cst_10 : f32 to vector<8x32xf32>
      %c0_11 = arith.constant 0 : index
      %c0_12 = arith.constant 0 : index
      %13 = vector.load %arg6[%c0_11, %c0_12] : memref<8x32xf32, #tpu.memory_space<vmem>>, vector<8x32xf32>
      tpu.vector_store %arg6[%c0_11, %c0_12], %12 {strides = array<i32>} : memref<8x32xf32, #tpu.memory_space<vmem>>, vector<8x32xf32>,
    } else {
    }
    %c0 = arith.constant 0 : index
    %c0_1 = arith.constant 0 : index
    %3 = vector.load %arg6[%c0, %c0_1] : memref<8x32xf32, #tpu.memory_space<vmem>>, vector<8x32xf32>
    %c0_2 = arith.constant 0 : index
    %c0_3 = arith.constant 0 : index
    %4 = vector.load %arg2[%c0_2, %c0_3] : memref<8x32xf32, #tpu.memory_space<vmem>>, vector<8x32xf32>
    %c0_4 = arith.constant 0 : index
    %c0_5 = arith.constant 0 : index
    %5 = vector.load %arg3[%c0_4, %c0_5] : memref<32x32xf32, #tpu.memory_space<vmem>>, vector<32x32xf32>
    %cst = arith.constant dense<0.000000e+00> : vector<8x32xf32>
    %6 = tpu.matmul %4, %5, %cst {dimension_numbers = #tpu.dot_dimension_numbers<[1], [0], [0], [1], [0, 0, 1, 1], [], []>} : vector<8x32xf32>, vector<32x32xf32>, vector<8x32xf32> -> vector<8x32xf32>
    %7 = arith.addf %3, %6 : vector<8x32xf32>
    %c0_6 = arith.constant 0 : index
    %c0_7 = arith.constant 0 : index
    %8 = vector.load %arg6[%c0_6, %c0_7] : memref<8x32xf32, #tpu.memory_space<vmem>>, vector<8x32xf32>
    tpu.vector_store %arg6[%c0_6, %c0_7], %7 {strides = array<i32>} : memref<8x32xf32, #tpu.memory_space<vmem>>, vector<8x32xf32>,
    %c0_i32_8 = arith.constant 0 : i32
    %9 = arith.cmpi eq, %arg1, %c0_i32_8 : i32
    %10 = arith.extui %9 : i1 to i32
    %c0_i32_9 = arith.constant 0 : i32
    %11 = arith.cmpi ne, %10, %c0_i32_9 : i32
    scf.if %11 {
      %c0_10 = arith.constant 0 : index
      %c0_11 = arith.constant 0 : index
      %12 = vector.load %arg6[%c0_10, %c0_11] : memref<8x32xf32, #tpu.memory_space<vmem>>, vector<8x32xf32>
      %c0_12 = arith.constant 0 : index
      %c0_13 = arith.constant 0 : index
      %13 = vector.load %arg4[%c0_12, %c0_13] : memref<1x32xf32, #tpu.memory_space<vmem>>, vector<1x32xf32>
      %14 = vector.broadcast %13 : vector<1x32xf32> to vector<8x32xf32>
      %15 = arith.addf %12, %14 : vector<8x32xf32>
      %c0_14 = arith.constant 0 : index
      %c0_15 = arith.constant 0 : index
      %16 = vector.load %arg5[%c0_14, %c0_15] : memref<8x32xf32, #tpu.memory_space<vmem>>, vector<8x32xf32>
      tpu.vector_store %arg5[%c0_14, %c0_15], %15 {strides = array<i32>} : memref<8x32xf32, #tpu.memory_space<vmem>>, vector<8x32xf32>,
    } else {
    }
    return
  }
  func.func @transform_0(%arg0: i32, %arg1: i32) -> (i32, i32) {
    %c0_i32 = arith.constant 0 : i32
    return %arg0, %arg1 : i32, i32
  }
  func.func @transform_1(%arg0: i32, %arg1: i32) -> (i32, i32) {
    %c0_i32 = arith.constant 0 : i32
    %c0_i32_0 = arith.constant 0 : i32
    return %arg1, %c0_i32 : i32, i32
  }
  func.func @transform_2(%arg0: i32, %arg1: i32) -> (i32, i32) {
    %c0_i32 = arith.constant 0 : i32
    %c0_i32_0 = arith.constant 0 : i32
    %c0_i32_1 = arith.constant 0 : i32
    return %c0_i32, %c0_i32_0 : i32, i32
  }
  func.func @transform_3(%arg0: i32, %arg1: i32) -> (i32, i32) {
    %c0_i32 = arith.constant 0 : i32
    %c0_i32_0 = arith.constant 0 : i32
    return %arg0, %c0_i32 : i32, i32
  }
}

module attributes {stable_mosaic.version = 11 : i64} {
  func.func @_qkv_attn_kernel(%arg0: i32, %arg1: i32, %arg2: i32, %arg3: memref<1x8x32xf32, #tpu.memory_space<vmem>>, %arg4: memref<32x96xf32, #tpu.memory_space<vmem>>, %arg5: memref<1x96xf32, #tpu.memory_space<vmem>>, %arg6: memref<1x4x8x8xf32, #tpu.memory_space<vmem>>, %arg7: memref<8x96xf32, #tpu.memory_space<vmem>>) attributes {dimension_semantics = [#tpu.dimension_semantics<parallel>, #tpu.dimension_semantics<parallel>, #tpu.dimension_semantics<arbitrary>], iteration_bounds = array<i64: 2, 1, 1>, scalar_prefetch = 0 : i64, scratch_operands = 1 : i64, tpu.core_type = #tpu.core_type<tc>, window_params = [{transform_indices = @transform_0, window_bounds = array<i64: 1, 8, 32>}, {pipeline_mode = #tpu.pipeline_mode<synchronous>, transform_indices = @transform_1, window_bounds = array<i64: 32, 96>}, {pipeline_mode = #tpu.pipeline_mode<synchronous>, transform_indices = @transform_2, window_bounds = array<i64: 1, 96>}, {transform_indices = @transform_3, window_bounds = array<i64: 1, 4, 8, 8>}]} {
    %c0_i32 = arith.constant 0 : i32
    %0 = arith.cmpi eq, %arg2, %c0_i32 : i32
    %1 = arith.extui %0 : i1 to i32
    %c0_i32_0 = arith.constant 0 : i32
    %2 = arith.cmpi ne, %1, %c0_i32_0 : i32
    scf.if %2 {
      %cst_11 = arith.constant 0.000000e+00 : f32
      %13 = vector.broadcast %cst_11 : f32 to vector<8x96xf32>
      %c0_12 = arith.constant 0 : index
      %c0_13 = arith.constant 0 : index
      %14 = vector.load %arg7[%c0_12, %c0_13] : memref<8x96xf32, #tpu.memory_space<vmem>>, vector<8x96xf32>
      tpu.vector_store %arg7[%c0_12, %c0_13], %13 {strides = array<i32>} : memref<8x96xf32, #tpu.memory_space<vmem>>, vector<8x96xf32>,
    } else {
    }
    %c0 = arith.constant 0 : index
    %c0_1 = arith.constant 0 : index
    %3 = vector.load %arg7[%c0, %c0_1] : memref<8x96xf32, #tpu.memory_space<vmem>>, vector<8x96xf32>
    %c0_2 = arith.constant 0 : index
    %c0_3 = arith.constant 0 : index
    %c0_4 = arith.constant 0 : index
    %4 = vector.load %arg3[%c0_2, %c0_3, %c0_4] : memref<1x8x32xf32, #tpu.memory_space<vmem>>, vector<1x8x32xf32>
    %5 = vector.shape_cast %4 : vector<1x8x32xf32> to vector<8x32xf32>
    %c0_5 = arith.constant 0 : index
    %c0_6 = arith.constant 0 : index
    %6 = vector.load %arg4[%c0_5, %c0_6] : memref<32x96xf32, #tpu.memory_space<vmem>>, vector<32x96xf32>
    %cst = arith.constant dense<0.000000e+00> : vector<8x96xf32>
    %7 = tpu.matmul %5, %6, %cst {dimension_numbers = #tpu.dot_dimension_numbers<[1], [0], [0], [1], [0, 0, 1, 1], [], []>} : vector<8x32xf32>, vector<32x96xf32>, vector<8x96xf32> -> vector<8x96xf32>
    %8 = arith.addf %3, %7 : vector<8x96xf32>
    %c0_7 = arith.constant 0 : index
    %c0_8 = arith.constant 0 : index
    %9 = vector.load %arg7[%c0_7, %c0_8] : memref<8x96xf32, #tpu.memory_space<vmem>>, vector<8x96xf32>
    tpu.vector_store %arg7[%c0_7, %c0_8], %8 {strides = array<i32>} : memref<8x96xf32, #tpu.memory_space<vmem>>, vector<8x96xf32>,
    %c0_i32_9 = arith.constant 0 : i32
    %10 = arith.cmpi eq, %arg2, %c0_i32_9 : i32
    %11 = arith.extui %10 : i1 to i32
    %c0_i32_10 = arith.constant 0 : i32
    %12 = arith.cmpi ne, %11, %c0_i32_10 : i32
    scf.if %12 {
      %c0_11 = arith.constant 0 : index
      %c0_12 = arith.constant 0 : index
      %13 = vector.load %arg7[%c0_11, %c0_12] : memref<8x96xf32, #tpu.memory_space<vmem>>, vector<8x96xf32>
      %c0_13 = arith.constant 0 : index
      %c0_14 = arith.constant 0 : index
      %14 = vector.load %arg5[%c0_13, %c0_14] : memref<1x96xf32, #tpu.memory_space<vmem>>, vector<1x96xf32>
      %15 = vector.broadcast %14 : vector<1x96xf32> to vector<8x96xf32>
      %16 = arith.addf %13, %15 : vector<8x96xf32>
      %17 = vector.extract_strided_slice %16 {offsets = [0, 0], sizes = [8, 32], strides = [1, 1]} : vector<8x96xf32> to vector<8x32xf32>
      %18 = vector.extract_strided_slice %16 {offsets = [0, 32], sizes = [8, 32], strides = [1, 1]} : vector<8x96xf32> to vector<8x32xf32>
      %19 = vector.extract_strided_slice %16 {offsets = [0, 64], sizes = [8, 32], strides = [1, 1]} : vector<8x96xf32> to vector<8x32xf32>
      %20 = vector.extract_strided_slice %18 {offsets = [0, 0], sizes = [8, 8], strides = [1, 1]} : vector<8x32xf32> to vector<8x8xf32>
      %21 = vector.extract_strided_slice %18 {offsets = [0, 8], sizes = [8, 8], strides = [1, 1]} : vector<8x32xf32> to vector<8x8xf32>
      %22 = vector.extract_strided_slice %18 {offsets = [0, 16], sizes = [8, 8], strides = [1, 1]} : vector<8x32xf32> to vector<8x8xf32>
      %23 = vector.extract_strided_slice %18 {offsets = [0, 24], sizes = [8, 8], strides = [1, 1]} : vector<8x32xf32> to vector<8x8xf32>
      %24 = vector.extract_strided_slice %19 {offsets = [0, 0], sizes = [8, 8], strides = [1, 1]} : vector<8x32xf32> to vector<8x8xf32>
      %25 = vector.extract_strided_slice %19 {offsets = [0, 8], sizes = [8, 8], strides = [1, 1]} : vector<8x32xf32> to vector<8x8xf32>
      %26 = vector.extract_strided_slice %19 {offsets = [0, 16], sizes = [8, 8], strides = [1, 1]} : vector<8x32xf32> to vector<8x8xf32>
      %27 = vector.extract_strided_slice %19 {offsets = [0, 24], sizes = [8, 8], strides = [1, 1]} : vector<8x32xf32> to vector<8x8xf32>
      %28 = vector.extract_strided_slice %17 {offsets = [0, 0], sizes = [8, 8], strides = [1, 1]} : vector<8x32xf32> to vector<8x8xf32>
      %29 = arith.mulf %28, %20 : vector<8x8xf32>
      %cst_15 = arith.constant dense<0.000000e+00> : vector<8xf32>
      %30 = vector.multi_reduction <add>, %29, %cst_15 [1] : vector<8x8xf32> to vector<8xf32>
      %31 = vector.shape_cast %30 : vector<8xf32> to vector<8x1xf32>
      %32 = arith.mulf %28, %21 : vector<8x8xf32>
      %cst_16 = arith.constant dense<0.000000e+00> : vector<8xf32>
      %33 = vector.multi_reduction <add>, %32, %cst_16 [1] : vector<8x8xf32> to vector<8xf32>
      %34 = vector.shape_cast %33 : vector<8xf32> to vector<8x1xf32>
      %35 = arith.mulf %28, %22 : vector<8x8xf32>
      %cst_17 = arith.constant dense<0.000000e+00> : vector<8xf32>
      %36 = vector.multi_reduction <add>, %35, %cst_17 [1] : vector<8x8xf32> to vector<8xf32>
      %37 = vector.shape_cast %36 : vector<8xf32> to vector<8x1xf32>
      %38 = arith.mulf %28, %23 : vector<8x8xf32>
      %cst_18 = arith.constant dense<0.000000e+00> : vector<8xf32>
      %39 = vector.multi_reduction <add>, %38, %cst_18 [1] : vector<8x8xf32> to vector<8xf32>
      %40 = vector.shape_cast %39 : vector<8xf32> to vector<8x1xf32>
      %41 = tpu.concatenate %31, %34, %37, %40 in 1 : vector<8x1xf32>, vector<8x1xf32>, vector<8x1xf32>, vector<8x1xf32> -> vector<8x4xf32>
      %cst_19 = arith.constant 0.353553385 : f32
      %42 = vector.broadcast %cst_19 : f32 to vector<8x4xf32>
      %43 = arith.mulf %41, %42 : vector<8x4xf32>
      %cst_20 = arith.constant dense<0xFF800000> : vector<8xf32>
      %44 = vector.multi_reduction <maximumf>, %43, %cst_20 [1] : vector<8x4xf32> to vector<8xf32>
      %45 = vector.shape_cast %44 : vector<8xf32> to vector<8x1xf32>
      %46 = vector.broadcast %45 : vector<8x1xf32> to vector<8x4xf32>
      %47 = arith.subf %43, %46 : vector<8x4xf32>
      %48 = math.exp %47 : vector<8x4xf32>
      %cst_21 = arith.constant dense<0.000000e+00> : vector<8xf32>
      %49 = vector.multi_reduction <add>, %48, %cst_21 [1] : vector<8x4xf32> to vector<8xf32>
      %50 = vector.shape_cast %49 : vector<8xf32> to vector<8x1xf32>
      %51 = tpu.reciprocal %50 : vector<8x1xf32> -> vector<8x1xf32>
      %52 = vector.broadcast %51 : vector<8x1xf32> to vector<8x4xf32>
      %53 = arith.mulf %48, %52 : vector<8x4xf32>
      %54 = vector.extract_strided_slice %53 {offsets = [0, 0], sizes = [8, 1], strides = [1, 1]} : vector<8x4xf32> to vector<8x1xf32>
      %55 = vector.broadcast %54 : vector<8x1xf32> to vector<8x8xf32>
      %56 = arith.mulf %55, %24 : vector<8x8xf32>
      %57 = vector.extract_strided_slice %53 {offsets = [0, 1], sizes = [8, 1], strides = [1, 1]} : vector<8x4xf32> to vector<8x1xf32>
      %58 = vector.broadcast %57 : vector<8x1xf32> to vector<8x8xf32>
      %59 = arith.mulf %58, %25 : vector<8x8xf32>
      %60 = arith.addf %56, %59 : vector<8x8xf32>
      %61 = vector.extract_strided_slice %53 {offsets = [0, 2], sizes = [8, 1], strides = [1, 1]} : vector<8x4xf32> to vector<8x1xf32>
      %62 = vector.broadcast %61 : vector<8x1xf32> to vector<8x8xf32>
      %63 = arith.mulf %62, %26 : vector<8x8xf32>
      %64 = arith.addf %60, %63 : vector<8x8xf32>
      %65 = vector.extract_strided_slice %53 {offsets = [0, 3], sizes = [8, 1], strides = [1, 1]} : vector<8x4xf32> to vector<8x1xf32>
      %66 = vector.broadcast %65 : vector<8x1xf32> to vector<8x8xf32>
      %67 = arith.mulf %66, %27 : vector<8x8xf32>
      %68 = arith.addf %64, %67 : vector<8x8xf32>
      %69 = vector.extract_strided_slice %17 {offsets = [0, 8], sizes = [8, 8], strides = [1, 1]} : vector<8x32xf32> to vector<8x8xf32>
      %70 = arith.mulf %69, %20 : vector<8x8xf32>
      %cst_22 = arith.constant dense<0.000000e+00> : vector<8xf32>
      %71 = vector.multi_reduction <add>, %70, %cst_22 [1] : vector<8x8xf32> to vector<8xf32>
      %72 = vector.shape_cast %71 : vector<8xf32> to vector<8x1xf32>
      %73 = arith.mulf %69, %21 : vector<8x8xf32>
      %cst_23 = arith.constant dense<0.000000e+00> : vector<8xf32>
      %74 = vector.multi_reduction <add>, %73, %cst_23 [1] : vector<8x8xf32> to vector<8xf32>
      %75 = vector.shape_cast %74 : vector<8xf32> to vector<8x1xf32>
      %76 = arith.mulf %69, %22 : vector<8x8xf32>
      %cst_24 = arith.constant dense<0.000000e+00> : vector<8xf32>
      %77 = vector.multi_reduction <add>, %76, %cst_24 [1] : vector<8x8xf32> to vector<8xf32>
      %78 = vector.shape_cast %77 : vector<8xf32> to vector<8x1xf32>
      %79 = arith.mulf %69, %23 : vector<8x8xf32>
      %cst_25 = arith.constant dense<0.000000e+00> : vector<8xf32>
      %80 = vector.multi_reduction <add>, %79, %cst_25 [1] : vector<8x8xf32> to vector<8xf32>
      %81 = vector.shape_cast %80 : vector<8xf32> to vector<8x1xf32>
      %82 = tpu.concatenate %72, %75, %78, %81 in 1 : vector<8x1xf32>, vector<8x1xf32>, vector<8x1xf32>, vector<8x1xf32> -> vector<8x4xf32>
      %cst_26 = arith.constant 0.353553385 : f32
      %83 = vector.broadcast %cst_26 : f32 to vector<8x4xf32>
      %84 = arith.mulf %82, %83 : vector<8x4xf32>
      %cst_27 = arith.constant dense<0xFF800000> : vector<8xf32>
      %85 = vector.multi_reduction <maximumf>, %84, %cst_27 [1] : vector<8x4xf32> to vector<8xf32>
      %86 = vector.shape_cast %85 : vector<8xf32> to vector<8x1xf32>
      %87 = vector.broadcast %86 : vector<8x1xf32> to vector<8x4xf32>
      %88 = arith.subf %84, %87 : vector<8x4xf32>
      %89 = math.exp %88 : vector<8x4xf32>
      %cst_28 = arith.constant dense<0.000000e+00> : vector<8xf32>
      %90 = vector.multi_reduction <add>, %89, %cst_28 [1] : vector<8x4xf32> to vector<8xf32>
      %91 = vector.shape_cast %90 : vector<8xf32> to vector<8x1xf32>
      %92 = tpu.reciprocal %91 : vector<8x1xf32> -> vector<8x1xf32>
      %93 = vector.broadcast %92 : vector<8x1xf32> to vector<8x4xf32>
      %94 = arith.mulf %89, %93 : vector<8x4xf32>
      %95 = vector.extract_strided_slice %94 {offsets = [0, 0], sizes = [8, 1], strides = [1, 1]} : vector<8x4xf32> to vector<8x1xf32>
      %96 = vector.broadcast %95 : vector<8x1xf32> to vector<8x8xf32>
      %97 = arith.mulf %96, %24 : vector<8x8xf32>
      %98 = vector.extract_strided_slice %94 {offsets = [0, 1], sizes = [8, 1], strides = [1, 1]} : vector<8x4xf32> to vector<8x1xf32>
      %99 = vector.broadcast %98 : vector<8x1xf32> to vector<8x8xf32>
      %100 = arith.mulf %99, %25 : vector<8x8xf32>
      %101 = arith.addf %97, %100 : vector<8x8xf32>
      %102 = vector.extract_strided_slice %94 {offsets = [0, 2], sizes = [8, 1], strides = [1, 1]} : vector<8x4xf32> to vector<8x1xf32>
      %103 = vector.broadcast %102 : vector<8x1xf32> to vector<8x8xf32>
      %104 = arith.mulf %103, %26 : vector<8x8xf32>
      %105 = arith.addf %101, %104 : vector<8x8xf32>
      %106 = vector.extract_strided_slice %94 {offsets = [0, 3], sizes = [8, 1], strides = [1, 1]} : vector<8x4xf32> to vector<8x1xf32>
      %107 = vector.broadcast %106 : vector<8x1xf32> to vector<8x8xf32>
      %108 = arith.mulf %107, %27 : vector<8x8xf32>
      %109 = arith.addf %105, %108 : vector<8x8xf32>
      %110 = vector.extract_strided_slice %17 {offsets = [0, 16], sizes = [8, 8], strides = [1, 1]} : vector<8x32xf32> to vector<8x8xf32>
      %111 = arith.mulf %110, %20 : vector<8x8xf32>
      %cst_29 = arith.constant dense<0.000000e+00> : vector<8xf32>
      %112 = vector.multi_reduction <add>, %111, %cst_29 [1] : vector<8x8xf32> to vector<8xf32>
      %113 = vector.shape_cast %112 : vector<8xf32> to vector<8x1xf32>
      %114 = arith.mulf %110, %21 : vector<8x8xf32>
      %cst_30 = arith.constant dense<0.000000e+00> : vector<8xf32>
      %115 = vector.multi_reduction <add>, %114, %cst_30 [1] : vector<8x8xf32> to vector<8xf32>
      %116 = vector.shape_cast %115 : vector<8xf32> to vector<8x1xf32>
      %117 = arith.mulf %110, %22 : vector<8x8xf32>
      %cst_31 = arith.constant dense<0.000000e+00> : vector<8xf32>
      %118 = vector.multi_reduction <add>, %117, %cst_31 [1] : vector<8x8xf32> to vector<8xf32>
      %119 = vector.shape_cast %118 : vector<8xf32> to vector<8x1xf32>
      %120 = arith.mulf %110, %23 : vector<8x8xf32>
      %cst_32 = arith.constant dense<0.000000e+00> : vector<8xf32>
      %121 = vector.multi_reduction <add>, %120, %cst_32 [1] : vector<8x8xf32> to vector<8xf32>
      %122 = vector.shape_cast %121 : vector<8xf32> to vector<8x1xf32>
      %123 = tpu.concatenate %113, %116, %119, %122 in 1 : vector<8x1xf32>, vector<8x1xf32>, vector<8x1xf32>, vector<8x1xf32> -> vector<8x4xf32>
      %cst_33 = arith.constant 0.353553385 : f32
      %124 = vector.broadcast %cst_33 : f32 to vector<8x4xf32>
      %125 = arith.mulf %123, %124 : vector<8x4xf32>
      %cst_34 = arith.constant dense<0xFF800000> : vector<8xf32>
      %126 = vector.multi_reduction <maximumf>, %125, %cst_34 [1] : vector<8x4xf32> to vector<8xf32>
      %127 = vector.shape_cast %126 : vector<8xf32> to vector<8x1xf32>
      %128 = vector.broadcast %127 : vector<8x1xf32> to vector<8x4xf32>
      %129 = arith.subf %125, %128 : vector<8x4xf32>
      %130 = math.exp %129 : vector<8x4xf32>
      %cst_35 = arith.constant dense<0.000000e+00> : vector<8xf32>
      %131 = vector.multi_reduction <add>, %130, %cst_35 [1] : vector<8x4xf32> to vector<8xf32>
      %132 = vector.shape_cast %131 : vector<8xf32> to vector<8x1xf32>
      %133 = tpu.reciprocal %132 : vector<8x1xf32> -> vector<8x1xf32>
      %134 = vector.broadcast %133 : vector<8x1xf32> to vector<8x4xf32>
      %135 = arith.mulf %130, %134 : vector<8x4xf32>
      %136 = vector.extract_strided_slice %135 {offsets = [0, 0], sizes = [8, 1], strides = [1, 1]} : vector<8x4xf32> to vector<8x1xf32>
      %137 = vector.broadcast %136 : vector<8x1xf32> to vector<8x8xf32>
      %138 = arith.mulf %137, %24 : vector<8x8xf32>
      %139 = vector.extract_strided_slice %135 {offsets = [0, 1], sizes = [8, 1], strides = [1, 1]} : vector<8x4xf32> to vector<8x1xf32>
      %140 = vector.broadcast %139 : vector<8x1xf32> to vector<8x8xf32>
      %141 = arith.mulf %140, %25 : vector<8x8xf32>
      %142 = arith.addf %138, %141 : vector<8x8xf32>
      %143 = vector.extract_strided_slice %135 {offsets = [0, 2], sizes = [8, 1], strides = [1, 1]} : vector<8x4xf32> to vector<8x1xf32>
      %144 = vector.broadcast %143 : vector<8x1xf32> to vector<8x8xf32>
      %145 = arith.mulf %144, %26 : vector<8x8xf32>
      %146 = arith.addf %142, %145 : vector<8x8xf32>
      %147 = vector.extract_strided_slice %135 {offsets = [0, 3], sizes = [8, 1], strides = [1, 1]} : vector<8x4xf32> to vector<8x1xf32>
      %148 = vector.broadcast %147 : vector<8x1xf32> to vector<8x8xf32>
      %149 = arith.mulf %148, %27 : vector<8x8xf32>
      %150 = arith.addf %146, %149 : vector<8x8xf32>
      %151 = vector.extract_strided_slice %17 {offsets = [0, 24], sizes = [8, 8], strides = [1, 1]} : vector<8x32xf32> to vector<8x8xf32>
      %152 = arith.mulf %151, %20 : vector<8x8xf32>
      %cst_36 = arith.constant dense<0.000000e+00> : vector<8xf32>
      %153 = vector.multi_reduction <add>, %152, %cst_36 [1] : vector<8x8xf32> to vector<8xf32>
      %154 = vector.shape_cast %153 : vector<8xf32> to vector<8x1xf32>
      %155 = arith.mulf %151, %21 : vector<8x8xf32>
      %cst_37 = arith.constant dense<0.000000e+00> : vector<8xf32>
      %156 = vector.multi_reduction <add>, %155, %cst_37 [1] : vector<8x8xf32> to vector<8xf32>
      %157 = vector.shape_cast %156 : vector<8xf32> to vector<8x1xf32>
      %158 = arith.mulf %151, %22 : vector<8x8xf32>
      %cst_38 = arith.constant dense<0.000000e+00> : vector<8xf32>
      %159 = vector.multi_reduction <add>, %158, %cst_38 [1] : vector<8x8xf32> to vector<8xf32>
      %160 = vector.shape_cast %159 : vector<8xf32> to vector<8x1xf32>
      %161 = arith.mulf %151, %23 : vector<8x8xf32>
      %cst_39 = arith.constant dense<0.000000e+00> : vector<8xf32>
      %162 = vector.multi_reduction <add>, %161, %cst_39 [1] : vector<8x8xf32> to vector<8xf32>
      %163 = vector.shape_cast %162 : vector<8xf32> to vector<8x1xf32>
      %164 = tpu.concatenate %154, %157, %160, %163 in 1 : vector<8x1xf32>, vector<8x1xf32>, vector<8x1xf32>, vector<8x1xf32> -> vector<8x4xf32>
      %cst_40 = arith.constant 0.353553385 : f32
      %165 = vector.broadcast %cst_40 : f32 to vector<8x4xf32>
      %166 = arith.mulf %164, %165 : vector<8x4xf32>
      %cst_41 = arith.constant dense<0xFF800000> : vector<8xf32>
      %167 = vector.multi_reduction <maximumf>, %166, %cst_41 [1] : vector<8x4xf32> to vector<8xf32>
      %168 = vector.shape_cast %167 : vector<8xf32> to vector<8x1xf32>
      %169 = vector.broadcast %168 : vector<8x1xf32> to vector<8x4xf32>
      %170 = arith.subf %166, %169 : vector<8x4xf32>
      %171 = math.exp %170 : vector<8x4xf32>
      %cst_42 = arith.constant dense<0.000000e+00> : vector<8xf32>
      %172 = vector.multi_reduction <add>, %171, %cst_42 [1] : vector<8x4xf32> to vector<8xf32>
      %173 = vector.shape_cast %172 : vector<8xf32> to vector<8x1xf32>
      %174 = tpu.reciprocal %173 : vector<8x1xf32> -> vector<8x1xf32>
      %175 = vector.broadcast %174 : vector<8x1xf32> to vector<8x4xf32>
      %176 = arith.mulf %171, %175 : vector<8x4xf32>
      %177 = vector.extract_strided_slice %176 {offsets = [0, 0], sizes = [8, 1], strides = [1, 1]} : vector<8x4xf32> to vector<8x1xf32>
      %178 = vector.broadcast %177 : vector<8x1xf32> to vector<8x8xf32>
      %179 = arith.mulf %178, %24 : vector<8x8xf32>
      %180 = vector.extract_strided_slice %176 {offsets = [0, 1], sizes = [8, 1], strides = [1, 1]} : vector<8x4xf32> to vector<8x1xf32>
      %181 = vector.broadcast %180 : vector<8x1xf32> to vector<8x8xf32>
      %182 = arith.mulf %181, %25 : vector<8x8xf32>
      %183 = arith.addf %179, %182 : vector<8x8xf32>
      %184 = vector.extract_strided_slice %176 {offsets = [0, 2], sizes = [8, 1], strides = [1, 1]} : vector<8x4xf32> to vector<8x1xf32>
      %185 = vector.broadcast %184 : vector<8x1xf32> to vector<8x8xf32>
      %186 = arith.mulf %185, %26 : vector<8x8xf32>
      %187 = arith.addf %183, %186 : vector<8x8xf32>
      %188 = vector.extract_strided_slice %176 {offsets = [0, 3], sizes = [8, 1], strides = [1, 1]} : vector<8x4xf32> to vector<8x1xf32>
      %189 = vector.broadcast %188 : vector<8x1xf32> to vector<8x8xf32>
      %190 = arith.mulf %189, %27 : vector<8x8xf32>
      %191 = arith.addf %187, %190 : vector<8x8xf32>
      %192 = vector.shape_cast %68 : vector<8x8xf32> to vector<1x8x8xf32>
      %193 = vector.shape_cast %109 : vector<8x8xf32> to vector<1x8x8xf32>
      %194 = vector.shape_cast %150 : vector<8x8xf32> to vector<1x8x8xf32>
      %195 = vector.shape_cast %191 : vector<8x8xf32> to vector<1x8x8xf32>
      %196 = tpu.concatenate %192, %193, %194, %195 in 0 : vector<1x8x8xf32>, vector<1x8x8xf32>, vector<1x8x8xf32>, vector<1x8x8xf32> -> vector<4x8x8xf32>
      %c0_43 = arith.constant 0 : index
      %c0_44 = arith.constant 0 : index
      %c0_45 = arith.constant 0 : index
      %c0_46 = arith.constant 0 : index
      %197 = vector.load %arg6[%c0_43, %c0_44, %c0_45, %c0_46] : memref<1x4x8x8xf32, #tpu.memory_space<vmem>>, vector<1x4x8x8xf32>
      %198 = vector.shape_cast %197 : vector<1x4x8x8xf32> to vector<4x8x8xf32>
      %199 = vector.shape_cast %196 : vector<4x8x8xf32> to vector<1x4x8x8xf32>
      tpu.vector_store %arg6[%c0_43, %c0_44, %c0_45, %c0_46], %199 {strides = array<i32>} : memref<1x4x8x8xf32, #tpu.memory_space<vmem>>, vector<1x4x8x8xf32>,
    } else {
    }
    return
  }
  func.func @transform_0(%arg0: i32, %arg1: i32, %arg2: i32) -> (i32, i32, i32) {
    %c0_i32 = arith.constant 0 : i32
    return %arg0, %arg1, %arg2 : i32, i32, i32
  }
  func.func @transform_1(%arg0: i32, %arg1: i32, %arg2: i32) -> (i32, i32) {
    %c0_i32 = arith.constant 0 : i32
    %c0_i32_0 = arith.constant 0 : i32
    return %arg2, %c0_i32 : i32, i32
  }
  func.func @transform_2(%arg0: i32, %arg1: i32, %arg2: i32) -> (i32, i32) {
    %c0_i32 = arith.constant 0 : i32
    %c0_i32_0 = arith.constant 0 : i32
    %c0_i32_1 = arith.constant 0 : i32
    return %c0_i32, %c0_i32_0 : i32, i32
  }
  func.func @transform_3(%arg0: i32, %arg1: i32, %arg2: i32) -> (i32, i32, i32, i32) {
    %c0_i32 = arith.constant 0 : i32
    %c0_i32_0 = arith.constant 0 : i32
    %c0_i32_1 = arith.constant 0 : i32
    return %arg0, %c0_i32, %arg1, %c0_i32_0 : i32, i32, i32, i32
  }
}

</mosaic_0001>

<llo_original>
// kernel: vanilla_attention_forward.3
$region0: #{vanilla_attention_forward.3}
  #allocation0 [shape = 'u32[]', space=smem, size = 0x4, offset = 0x4, fixed_abs, tag = 'smem constant byte address 0x4 - core index']
  #allocation1 [shape = 'u32[72,128]{1,0:T(1,128)}', space=vmem, size = 0x9000, scoped, tag = 'internal scratch']
  #allocation2 [shape = 'f32[8,32]{1,0:T(8,128)}', space=vmem, size = 0x1000, scoped, tag = 'scratch operand']
  %s0 = inlined_call_operand.vmem [shape: f32[16,32], index: 0, kind: input, shape index: {}]
  %s1 = inlined_call_operand.vmem [shape: f32[32,32], index: 1, kind: input, shape index: {}]
  %s2 = inlined_call_operand.vmem [shape: f32[1,32], index: 2, kind: input, shape index: {}]
  %s3 = inlined_call_operand.hbm [shape: f32[16,32], index: 3, kind: output, shape index: {}]
  %s4 = sld [smem:[#allocation0]]
  $region53: #{vanilla_attention_forward.3} parent=0
    _
  %s6 = ssub.s32 1, %s4
  %s7 = scalar_select 0, %s6, %s4
  $region1: #{vanilla_attention_forward.3} parent=0
    #allocation3 [shape = 'u8[8192]{0}', space=vmem, size = 0x2000, scoped, tag = 'output window, operand 0']
    #allocation4 [shape = 's32[2]{0}', space=sflag, size = 0x8, scoped, tag = 'scoped memory for vanilla_attention_forward.3']
    %8 = vsyncpa [#allocation4], 0
    %s9 = scalar_lea.sflag [#allocation4], 1
    %10 = vsyncpa %s9, 0
    loop: start=0, step=1, limit=4
    $region2: #{vanilla_attention_forward.3} parent=1 // loop_pre_header
      _
    $region3: #{vanilla_attention_forward.3} parent=1 // loop_header
      %s12 = sphi 0, %s16
      %p13 = scmp.ge.s32.totalorder %s12, 4
      %s19 = sphi 0, %s31
      %s20 = sphi 0, %s27
      %s21 = sphi 0, %s19
      %s22 = sphi 0, %s20
      %s23 = sphi 0, %s21
      %s24 = sphi 0, %s22
      %s36 = sphi 0, %s38
      %s39 = sphi 0, %s36
      %s40 = sphi 0, %s39
      %s56 = sphi 0, %s40
      %s62 = sphi 0, %s64
      %s65 = sphi 0, %s62
      %s66 = sphi 0, %s65
      %s82 = sphi 0, %s66
      %s86 = sphi 0, %s86
      %s88 = sphi 0, %s86
      %s89 = sphi 0, %s88
      %s103 = sphi 0, %s89
      %s109 = sphi 0, %s111
      %s112 = sphi 0, %s109
      %s113 = sphi 0, %s112
      %s129 = sphi 0, %s113
    $region4: #{vanilla_attention_forward.3} parent=1 // loop_header_branch
      %15 = sbr.rel (%p13) target = $region8
    $region5: #{vanilla_attention_forward.3} parent=1 // loop_body
      %s17 = ssub.s32 %s12, 1
      %s18 = ssub.s32 %s12, 2
      %s25 = sadd.s32 1, %s20
      %p26 = scmp.ge.s32.totalorder %s25, 1
      %s27 = scalar_select %p26, 0, %s25
      %s28 = sadd.s32 1, %s19
      %s29 = scalar_select %p26, %s28, %s19
      %p30 = scmp.ge.s32.totalorder %s29, 2
      %s31 = scalar_select %p30, 0, %s29
      %s32 = ssub.s32 %s19, %s31
      %s33 = ssub.s32 %s20, %s27
      %s34 = sor.u32 %s32, %s33
      %p35 = scmp.eq.s32.totalorder %s34, 0
      %s37 = sadd.s32 %s36, 1
      %s38 = scalar_select %p35, %s36, %s37
      %p41 = pneg %p35
      %p42 = scmp.eq.s32.totalorder %s12, 1
      %p43 = por %p41, %p42
      %p44 = scmp.ne.s32.totalorder %s36, %s39
      %p45 = scmp.eq.s32.totalorder %s12, 0
      %p46 = por %p44, %p45
      %p47 = scmp.ne.s32.totalorder %s36, %s39
      %p48 = scmp.eq.s32.totalorder %s17, 1
      %p49 = por %p47, %p48
      %p50 = scmp.ne.s32.totalorder %s39, %s40
      %p51 = scmp.eq.s32.totalorder %s17, 0
      %p52 = por %p50, %p51
      %p53 = scmp.ne.s32.totalorder %s39, %s40
      %p54 = scmp.eq.s32.totalorder %s18, 1
      %p55 = por %p53, %p54
      %p57 = scmp.ne.s32.totalorder %s40, %s56
      %p58 = scmp.eq.s32.totalorder %s18, 0
      %p59 = por %p57, %p58
      %s60 = ssub.s32 %s20, %s27
      %p61 = scmp.eq.s32.totalorder %s60, 0
      %s63 = sadd.s32 %s62, 1
      %s64 = scalar_select %p61, %s62, %s63
      %p67 = pneg %p61
      %p68 = scmp.eq.s32.totalorder %s12, 1
      %p69 = por %p67, %p68
      %p70 = scmp.ne.s32.totalorder %s62, %s65
      %p71 = scmp.eq.s32.totalorder %s12, 0
      %p72 = por %p70, %p71
      %p73 = scmp.ne.s32.totalorder %s62, %s65
      %p74 = scmp.eq.s32.totalorder %s17, 1
      %p75 = por %p73, %p74
      %p76 = scmp.ne.s32.totalorder %s65, %s66
      %p77 = scmp.eq.s32.totalorder %s17, 0
      %p78 = por %p76, %p77
      %p79 = scmp.ne.s32.totalorder %s65, %s66
      %p80 = scmp.eq.s32.totalorder %s18, 1
      %p81 = por %p79, %p80
      %p83 = scmp.ne.s32.totalorder %s66, %s82
      %p84 = scmp.eq.s32.totalorder %s18, 0
      %p85 = por %p83, %p84
      %s87 = sadd.s32 %s86, 1
      %p90 = scmp.eq.s32.totalorder %s12, 1
      %p91 = scmp.ne.s32.totalorder %s86, %s88
      %p92 = scmp.eq.s32.totalorder %s12, 0
      %p93 = por %p91, %p92
      %p94 = scmp.ne.s32.totalorder %s86, %s88
      %p95 = scmp.eq.s32.totalorder %s17, 1
      %p96 = por %p94, %p95
      %p97 = scmp.ne.s32.totalorder %s88, %s89
      %p98 = scmp.eq.s32.totalorder %s17, 0
      %p99 = por %p97, %p98
      %p100 = scmp.ne.s32.totalorder %s88, %s89
      %p101 = scmp.eq.s32.totalorder %s18, 1
      %p102 = por %p100, %p101
      %p104 = scmp.ne.s32.totalorder %s89, %s103
      %p105 = scmp.eq.s32.totalorder %s18, 0
      %p106 = por %p104, %p105
      %s107 = ssub.s32 %s19, %s31
      %p108 = scmp.eq.s32.totalorder %s107, 0
      %s110 = sadd.s32 %s109, 1
      %s111 = scalar_select %p108, %s109, %s110
      %p114 = pneg %p108
      %p115 = scmp.eq.s32.totalorder %s12, 1
      %p116 = por %p114, %p115
      %p117 = scmp.ne.s32.totalorder %s109, %s112
      %p118 = scmp.eq.s32.totalorder %s12, 0
      %p119 = por %p117, %p118
      %p120 = scmp.ne.s32.totalorder %s109, %s112
      %p121 = scmp.eq.s32.totalorder %s17, 1
      %p122 = por %p120, %p121
      %p123 = scmp.ne.s32.totalorder %s112, %s113
      %p124 = scmp.eq.s32.totalorder %s17, 0
      %p125 = por %p123, %p124
      %p126 = scmp.ne.s32.totalorder %s112, %s113
      %p127 = scmp.eq.s32.totalorder %s18, 1
      %p128 = por %p126, %p127
      %p130 = scmp.ne.s32.totalorder %s113, %s129
      %p131 = scmp.eq.s32.totalorder %s18, 0
      %p132 = por %p130, %p131
      %p133 = scmp.le.s32.totalorder 1, %s12
      %p134 = scmp.lt.s32.totalorder %s12, 3
      %p135 = pnand %p133, %p134
      %p136 = pneg %p135
      // Predicated region
      $region9: #{vanilla_attention_forward.3} parent=5 // pred_check
        _
      $region10: #{vanilla_attention_forward.3} parent=5 // pred_check_branch
        %138 = sbr.rel (%p135) target = $region12
      $region11: #{vanilla_attention_forward.3} parent=5 // pred_region
        %s139 = ssub.s32 %s12, 1
        // Predicated region
        $region13: #{vanilla_attention_forward.3} parent=11 // pred_check
          %p140 = pneg %p78
        $region14: #{vanilla_attention_forward.3} parent=11 // pred_check_branch
          %142 = sbr.rel (%p140) target = $region16
        $region15: #{vanilla_attention_forward.3} parent=11 // pred_region
          %s143 = smul.u32 4, %s22
          %p144 = scmp.lt.s32.totalorder %s143, 3
          %s145 = scalar_select %p144, %s143, 3
          %s146 = smul.addr %s145, 8
          %s147 = scalar_lea.vmem %s1, %s146
          %s148 = smul.u32 4, %s22
        $region16: #{vanilla_attention_forward.3} parent=11 // pred_fallthru
          _
        // Predicated region
        $region17: #{vanilla_attention_forward.3} parent=11 // pred_check
          %p149 = pneg %p99
        $region18: #{vanilla_attention_forward.3} parent=11 // pred_check_branch
          %151 = sbr.rel (%p149) target = $region20
        $region19: #{vanilla_attention_forward.3} parent=11 // pred_region
          _
        $region20: #{vanilla_attention_forward.3} parent=11 // pred_fallthru
          _
      $region12: #{vanilla_attention_forward.3} parent=5 // pred_fallthru
        _
      %p152 = scmp.lt.s32.totalorder %s12, 2
      // Predicated region
      $region21: #{vanilla_attention_forward.3} parent=5 // pred_check
        %p153 = pneg %p152
      $region22: #{vanilla_attention_forward.3} parent=5 // pred_check_branch
        %155 = sbr.rel (%p153) target = $region24
      $region23: #{vanilla_attention_forward.3} parent=5 // pred_region
        // Predicated region
        $region25: #{vanilla_attention_forward.3} parent=23 // pred_check
          %p156 = pneg %p46
        $region26: #{vanilla_attention_forward.3} parent=23 // pred_check_branch
          %158 = sbr.rel (%p156) target = $region28
        $region27: #{vanilla_attention_forward.3} parent=23 // pred_region
          %p159 = scmp.lt.s32.totalorder %s19, 1
          %s160 = scalar_select %p159, %s19, 1
          %p161 = scmp.lt.s32.totalorder %s20, 0
          %s162 = scalar_select %p161, %s20, 0
          %s163 = sadd.s32 %s162, %s160
          %s164 = smul.addr %s163, 8
          %s165 = scalar_lea.vmem %s0, %s164
        $region28: #{vanilla_attention_forward.3} parent=23 // pred_fallthru
          _
      $region24: #{vanilla_attention_forward.3} parent=5 // pred_fallthru
        _
      %p166 = scmp.le.s32.totalorder 1, %s12
      %p167 = scmp.lt.s32.totalorder %s12, 3
      %p168 = pnand %p166, %p167
      %p169 = pneg %p168
      // Predicated region
      $region29: #{vanilla_attention_forward.3} parent=5 // pred_check
        _
      $region30: #{vanilla_attention_forward.3} parent=5 // pred_check_branch
        %171 = sbr.rel (%p168) target = $region32
      $region31: #{vanilla_attention_forward.3} parent=5 // pred_region
        %s172 = ssub.s32 %s12, 1
        %p173 = scmp.lt.s32.totalorder %s21, 1
        %s174 = scalar_select %p173, %s21, 1
        %p175 = scmp.lt.s32.totalorder %s22, 0
        %s176 = scalar_select %p175, %s22, 0
        %s177 = sadd.s32 %s176, %s174
        %s178 = smul.addr %s177, 8
        %s179 = scalar_lea.vmem %s0, %s178
        %p180 = pneg %p52
        %p181 = pneg %p49
        %s182 = smul.u32 4, %s22
        %p183 = scmp.lt.s32.totalorder %s182, 3
        %s184 = scalar_select %p183, %s182, 3
        %s185 = smul.addr %s184, 8
        %s186 = scalar_lea.vmem %s1, %s185
        %p187 = pneg %p78
        %p188 = pneg %p75
        %p189 = pneg %p99
        %p190 = pneg %p96
        %p191 = pneg %p125
        %p192 = pneg %p122
        %s193 = sand.u32 %s112, 1
        %s194 = scalar_lea.sflag [#allocation4], %s193
        %s195 = sand.u32 %s112, 1
        %s196 = smul.addr %s195, 8
        %s197 = scalar_lea.vmem [#allocation3], %s196
        %p198 = scmp.lt.s32.totalorder %s21, 1
        %s199 = scalar_select %p198, %s21, 1
        %p200 = scmp.lt.s32.totalorder %s22, 0
        %s201 = scalar_select %p200, %s22, 0
        %s202 = sadd.s32 %s201, %s199
        %s203 = smul.addr %s202, 8
        %s204 = scalar_lea.vmem %s0, %s203
        %s205 = smul.u32 4, %s22
        %p206 = scmp.lt.s32.totalorder %s205, 3
        %s207 = scalar_select %p206, %s205, 3
        %s208 = smul.addr %s207, 8
        %s209 = scalar_lea.vmem %s1, %s208
        %s210 = smul.u32 4, %s22
        %p211 = scmp.eq.s32.totalorder %s22, 0
        // Predicated region
        $region33: #{vanilla_attention_forward.3} parent=31 // pred_check
          %p212 = pneg %p211
        $region34: #{vanilla_attention_forward.3} parent=31 // pred_check_branch
          %214 = sbr.rel (%p212) target = $region36
        $region35: #{vanilla_attention_forward.3} parent=31 // pred_region
          %vm215 = vcmask 261120
          %216 = vst.msk [vmem:[#allocation2] sm:$0xff] %vm215, 0.0
        $region36: #{vanilla_attention_forward.3} parent=31 // pred_fallthru
          _
        %v217 = vld [vmem:[#allocation2] sm:$0xff]
        %v218 = vld [vmem:[%s204] sm:$0xff]
        %v219 = vld [vmem:[%s209] sm:$0xff]
        %v220 = vld [vmem:[%s209 + $0x8] sm:$0xff]
        %v221 = vld [vmem:[%s209 + $0x10] sm:$0xff]
        %v222 = vld [vmem:[%s209 + $0x18] sm:$0xff]
        %vm223 = vcmask 261120
        %v225 = vsel %vm223, %v218, 0
        %227 = vmatpush.msra.mxu0 0.0
        %228 = vmatpush.msra.mxu0 0.0
        %229 = vmatpush.msra.mxu0 0.0
        %230 = vmatpush.msra.mxu0 0.0
        %231 = vmatpush.msra.mxu0 0.0
        %232 = vmatpush.msra.mxu0 0.0
        %233 = vmatpush.msra.mxu0 0.0
        %234 = vmatpush.msra.mxu0 0.0
        %235 = vmatpush.msra.mxu0 0.0
        %236 = vmatpush.msra.mxu0 0.0
        %237 = vmatpush.msra.mxu0 0.0
        %238 = vmatpush.msra.mxu0 0.0
        %239 = vmatpush.msra.mxu0 %v222
        %240 = vmatpush.msra.mxu0 %v221
        %241 = vmatpush.msra.mxu0 %v220
        %242 = vmatpush.msra.mxu0 %v219
        %243 = vmatmul.f32.gmra.mxu0 %v225
        %v244 = vpop.f32.mrf.mxu0
        %v245 = vadd.f32 0.0, %v244
        %246 = vdwg.mxu0
        %v247 = vadd.f32 %v217, %v245
        %248 = vst.msk [vmem:[#allocation2] sm:$0xff] %vm223, %v247
        // Predicated region
        $region37: #{vanilla_attention_forward.3} parent=31 // pred_check
          %p249 = pneg %p211
        $region38: #{vanilla_attention_forward.3} parent=31 // pred_check_branch
          %251 = sbr.rel (%p249) target = $region40
        $region39: #{vanilla_attention_forward.3} parent=31 // pred_region
          %v252 = vld [vmem:[#allocation2] sm:$0xff]
          %v253 = vld [vmem:[%s2] sm:$0x1]
          %v255 = vperm.slane %v253, 0
          %v257 = vadd.f32 %v252, %v255
          %258 = vst.msk [vmem:[%s197] sm:$0xff] %vm223, %v257
        $region40: #{vanilla_attention_forward.3} parent=31 // pred_fallthru
          _
        %s259 = sand.u32 %s112, 1
        %s260 = scalar_lea.sflag [#allocation4], %s259
        %s261 = sand.u32 %s112, 1
        %s262 = smul.addr %s261, 8
        %s263 = scalar_lea.vmem [#allocation3], %s262
        // Predicated region
        $region41: #{vanilla_attention_forward.3} parent=31 // pred_check
          %p264 = pneg %p122
        $region42: #{vanilla_attention_forward.3} parent=31 // pred_check_branch
          %266 = sbr.rel (%p264) target = $region44
        $region43: #{vanilla_attention_forward.3} parent=31 // pred_region
          %268 = vsyncadd %s260, 0
          %s269 = smul.addr %s21, 8
          %s270 = scalar_lea.hbm %s3, %s269
          %s272 = sshll.u32 %s263, 4
          %s273 = int_to_ptr.vmem [resolvable:$true] %s272
          %s274 = sshll.u32 %s270, 4
          %s275 = int_to_ptr.hbm [resolvable:$true] %s274
          %277 = dma.vmem_to_hbm [thread:$0]  %s273, 128, %s275, %s260
        $region44: #{vanilla_attention_forward.3} parent=31 // pred_fallthru
          _
      $region32: #{vanilla_attention_forward.3} parent=5 // pred_fallthru
        _
      %p278 = scmp.le.s32.totalorder 2, %s12
      // Predicated region
      $region45: #{vanilla_attention_forward.3} parent=5 // pred_check
        %p279 = pneg %p278
      $region46: #{vanilla_attention_forward.3} parent=5 // pred_check_branch
        %281 = sbr.rel (%p279) target = $region48
      $region47: #{vanilla_attention_forward.3} parent=5 // pred_region
        %s282 = ssub.s32 %s12, 2
        // Predicated region
        $region49: #{vanilla_attention_forward.3} parent=47 // pred_check
          %p283 = pneg %p128
        $region50: #{vanilla_attention_forward.3} parent=47 // pred_check_branch
          %285 = sbr.rel (%p283) target = $region52
        $region51: #{vanilla_attention_forward.3} parent=47 // pred_region
          %s286 = sand.u32 %s113, 1
          %s287 = scalar_lea.sflag [#allocation4], %s286
          %s288 = sand.u32 %s113, 1
          %s289 = smul.addr %s288, 8
          %s290 = scalar_lea.vmem [#allocation3], %s289
          %292 = dma.done %s287, 128
        $region52: #{vanilla_attention_forward.3} parent=47 // pred_fallthru
          _
      $region48: #{vanilla_attention_forward.3} parent=5 // pred_fallthru
        _
    $region6: #{vanilla_attention_forward.3} parent=1 // loop_footer
      %s16 = sadd.s32 1, %s12
    $region7: #{vanilla_attention_forward.3} parent=1 // loop_footer_branch
      %11 = sbr.rel target = $region3
    $region8: #{vanilla_attention_forward.3} parent=1 // loop_exit
      _
    %293 = vsyncpa [#allocation4], 1
    %s294 = scalar_lea.sflag [#allocation4], 1
    %295 = vsyncpa %s294, 1

// kernel: vanilla_attention_forward.2
$region0: #{vanilla_attention_forward.2}
  #allocation0 [shape = 'u32[]', space=smem, size = 0x4, offset = 0x4, fixed_abs, tag = 'smem constant byte address 0x4 - core index']
  #allocation1 [shape = 'u32[72,128]{1,0:T(1,128)}', space=vmem, size = 0x9000, scoped, tag = 'internal scratch']
  #allocation2 [shape = 'f32[8,96]{1,0:T(8,128)}', space=vmem, size = 0x1000, scoped, tag = 'scratch operand']
  %s0 = inlined_call_operand.hbm [shape: f32[2,8,32], index: 0, kind: input, shape index: {}]
  %s1 = inlined_call_operand.hbm [shape: f32[32,96], index: 1, kind: input, shape index: {}]
  %s2 = inlined_call_operand.vmem [shape: f32[1,96], index: 2, kind: input, shape index: {}]
  %s3 = inlined_call_operand.vmem [shape: f32[2,4,8,8], index: 3, kind: output, shape index: {}]
  %s4 = sld [smem:[#allocation0]]
  $region61: #{vanilla_attention_forward.2} parent=0
    _
  %s6 = ssub.s32 1, %s4
  %s7 = scalar_select 0, %s6, %s4
  $region1: #{vanilla_attention_forward.2} parent=0
    #allocation3 [shape = 'u8[8192]{0}', space=vmem, size = 0x2000, scoped, tag = 'input window, operand 0']
    #allocation4 [shape = 's32[2]{0}', space=sflag, size = 0x8, scoped, tag = 'scoped memory for vanilla_attention_forward.2']
    #allocation5 [shape = 'u8[16384]{0}', space=vmem, size = 0x4000, scoped, tag = 'input window, operand 1, single buffered']
    #allocation6 [shape = 's32[1]{0}', space=sflag, size = 0x4, scoped, tag = 'scoped memory for vanilla_attention_forward.2']
    %8 = vsyncpa [#allocation4], 0
    %s9 = scalar_lea.sflag [#allocation4], 1
    %10 = vsyncpa %s9, 0
    %11 = vsyncpa [#allocation6], 0
    loop: start=0, step=1, limit=4
    $region2: #{vanilla_attention_forward.2} parent=1 // loop_pre_header
      _
    $region3: #{vanilla_attention_forward.2} parent=1 // loop_header
      %s13 = sphi 0, %s17
      %p14 = scmp.ge.s32.totalorder %s13, 4
      %s20 = sphi 0, %s39
      %s21 = sphi 0, %s35
      %s22 = sphi 0, %s31
      %s23 = sphi 0, %s20
      %s24 = sphi 0, %s21
      %s25 = sphi 0, %s22
      %s26 = sphi 0, %s23
      %s27 = sphi 0, %s24
      %s28 = sphi 0, %s25
      %s46 = sphi 0, %s48
      %s49 = sphi 0, %s46
      %s50 = sphi 0, %s49
      %s66 = sphi 0, %s50
      %s72 = sphi 0, %s74
      %s75 = sphi 0, %s72
      %s76 = sphi 0, %s75
      %s92 = sphi 0, %s76
      %s96 = sphi 0, %s96
      %s98 = sphi 0, %s96
      %s99 = sphi 0, %s98
      %s113 = sphi 0, %s99
      %s121 = sphi 0, %s123
      %s124 = sphi 0, %s121
      %s125 = sphi 0, %s124
      %s141 = sphi 0, %s125
    $region4: #{vanilla_attention_forward.2} parent=1 // loop_header_branch
      %16 = sbr.rel (%p14) target = $region8
    $region5: #{vanilla_attention_forward.2} parent=1 // loop_body
      %s18 = ssub.s32 %s13, 1
      %s19 = ssub.s32 %s13, 2
      %s29 = sadd.s32 1, %s22
      %p30 = scmp.ge.s32.totalorder %s29, 1
      %s31 = scalar_select %p30, 0, %s29
      %s32 = sadd.s32 1, %s21
      %s33 = scalar_select %p30, %s32, %s21
      %p34 = scmp.ge.s32.totalorder %s33, 1
      %s35 = scalar_select %p34, 0, %s33
      %s36 = sadd.s32 1, %s20
      %s37 = scalar_select %p34, %s36, %s20
      %p38 = scmp.ge.s32.totalorder %s37, 2
      %s39 = scalar_select %p38, 0, %s37
      %s40 = ssub.s32 %s20, %s39
      %s41 = ssub.s32 %s21, %s35
      %s42 = sor.u32 %s40, %s41
      %s43 = ssub.s32 %s22, %s31
      %s44 = sor.u32 %s42, %s43
      %p45 = scmp.eq.s32.totalorder %s44, 0
      %s47 = sadd.s32 %s46, 1
      %s48 = scalar_select %p45, %s46, %s47
      %p51 = pneg %p45
      %p52 = scmp.eq.s32.totalorder %s13, 1
      %p53 = por %p51, %p52
      %p54 = scmp.ne.s32.totalorder %s46, %s49
      %p55 = scmp.eq.s32.totalorder %s13, 0
      %p56 = por %p54, %p55
      %p57 = scmp.ne.s32.totalorder %s46, %s49
      %p58 = scmp.eq.s32.totalorder %s18, 1
      %p59 = por %p57, %p58
      %p60 = scmp.ne.s32.totalorder %s49, %s50
      %p61 = scmp.eq.s32.totalorder %s18, 0
      %p62 = por %p60, %p61
      %p63 = scmp.ne.s32.totalorder %s49, %s50
      %p64 = scmp.eq.s32.totalorder %s19, 1
      %p65 = por %p63, %p64
      %p67 = scmp.ne.s32.totalorder %s50, %s66
      %p68 = scmp.eq.s32.totalorder %s19, 0
      %p69 = por %p67, %p68
      %s70 = ssub.s32 %s22, %s31
      %p71 = scmp.eq.s32.totalorder %s70, 0
      %s73 = sadd.s32 %s72, 1
      %s74 = scalar_select %p71, %s72, %s73
      %p77 = pneg %p71
      %p78 = scmp.eq.s32.totalorder %s13, 1
      %p79 = por %p77, %p78
      %p80 = scmp.ne.s32.totalorder %s72, %s75
      %p81 = scmp.eq.s32.totalorder %s13, 0
      %p82 = por %p80, %p81
      %p83 = scmp.ne.s32.totalorder %s72, %s75
      %p84 = scmp.eq.s32.totalorder %s18, 1
      %p85 = por %p83, %p84
      %p86 = scmp.ne.s32.totalorder %s75, %s76
      %p87 = scmp.eq.s32.totalorder %s18, 0
      %p88 = por %p86, %p87
      %p89 = scmp.ne.s32.totalorder %s75, %s76
      %p90 = scmp.eq.s32.totalorder %s19, 1
      %p91 = por %p89, %p90
      %p93 = scmp.ne.s32.totalorder %s76, %s92
      %p94 = scmp.eq.s32.totalorder %s19, 0
      %p95 = por %p93, %p94
      %s97 = sadd.s32 %s96, 1
      %p100 = scmp.eq.s32.totalorder %s13, 1
      %p101 = scmp.ne.s32.totalorder %s96, %s98
      %p102 = scmp.eq.s32.totalorder %s13, 0
      %p103 = por %p101, %p102
      %p104 = scmp.ne.s32.totalorder %s96, %s98
      %p105 = scmp.eq.s32.totalorder %s18, 1
      %p106 = por %p104, %p105
      %p107 = scmp.ne.s32.totalorder %s98, %s99
      %p108 = scmp.eq.s32.totalorder %s18, 0
      %p109 = por %p107, %p108
      %p110 = scmp.ne.s32.totalorder %s98, %s99
      %p111 = scmp.eq.s32.totalorder %s19, 1
      %p112 = por %p110, %p111
      %p114 = scmp.ne.s32.totalorder %s99, %s113
      %p115 = scmp.eq.s32.totalorder %s19, 0
      %p116 = por %p114, %p115
      %s117 = ssub.s32 %s20, %s39
      %s118 = ssub.s32 %s21, %s35
      %s119 = sor.u32 %s117, %s118
      %p120 = scmp.eq.s32.totalorder %s119, 0
      %s122 = sadd.s32 %s121, 1
      %s123 = scalar_select %p120, %s121, %s122
      %p126 = pneg %p120
      %p127 = scmp.eq.s32.totalorder %s13, 1
      %p128 = por %p126, %p127
      %p129 = scmp.ne.s32.totalorder %s121, %s124
      %p130 = scmp.eq.s32.totalorder %s13, 0
      %p131 = por %p129, %p130
      %p132 = scmp.ne.s32.totalorder %s121, %s124
      %p133 = scmp.eq.s32.totalorder %s18, 1
      %p134 = por %p132, %p133
      %p135 = scmp.ne.s32.totalorder %s124, %s125
      %p136 = scmp.eq.s32.totalorder %s18, 0
      %p137 = por %p135, %p136
      %p138 = scmp.ne.s32.totalorder %s124, %s125
      %p139 = scmp.eq.s32.totalorder %s19, 1
      %p140 = por %p138, %p139
      %p142 = scmp.ne.s32.totalorder %s125, %s141
      %p143 = scmp.eq.s32.totalorder %s19, 0
      %p144 = por %p142, %p143
      %p145 = scmp.le.s32.totalorder 1, %s13
      %p146 = scmp.lt.s32.totalorder %s13, 3
      %p147 = pnand %p145, %p146
      %p148 = pneg %p147
      // Predicated region
      $region9: #{vanilla_attention_forward.2} parent=5 // pred_check
        _
      $region10: #{vanilla_attention_forward.2} parent=5 // pred_check_branch
        %150 = sbr.rel (%p147) target = $region12
      $region11: #{vanilla_attention_forward.2} parent=5 // pred_region
        %s151 = ssub.s32 %s13, 1
        // Predicated region
        $region13: #{vanilla_attention_forward.2} parent=11 // pred_check
          %p152 = pneg %p88
        $region14: #{vanilla_attention_forward.2} parent=11 // pred_check_branch
          %154 = sbr.rel (%p152) target = $region16
        $region15: #{vanilla_attention_forward.2} parent=11 // pred_region
          %s155 = smul.u32 4, %s25
          %157 = vsyncadd [#allocation6], 0
          %s158 = smul.addr %s155, 8
          %s159 = scalar_lea.hbm %s1, %s158
          %s160 = sshll.u32 %s159, 4
          %s161 = int_to_ptr.hbm [resolvable:$true] %s160
          %s162 = sshll.u32 [#allocation5], 4
          %s163 = int_to_ptr.vmem [resolvable:$true] %s162
          %168 = dma.hbm_to_vmem [thread:$0]  %s161, 512, %s163, [#allocation6], 128, 128, 8
        $region16: #{vanilla_attention_forward.2} parent=11 // pred_fallthru
          _
        // Predicated region
        $region17: #{vanilla_attention_forward.2} parent=11 // pred_check
          %p169 = pneg %p109
        $region18: #{vanilla_attention_forward.2} parent=11 // pred_check_branch
          %171 = sbr.rel (%p169) target = $region20
        $region19: #{vanilla_attention_forward.2} parent=11 // pred_region
          _
        $region20: #{vanilla_attention_forward.2} parent=11 // pred_fallthru
          _
      $region12: #{vanilla_attention_forward.2} parent=5 // pred_fallthru
        _
      %p172 = scmp.lt.s32.totalorder %s13, 2
      // Predicated region
      $region21: #{vanilla_attention_forward.2} parent=5 // pred_check
        %p173 = pneg %p172
      $region22: #{vanilla_attention_forward.2} parent=5 // pred_check_branch
        %175 = sbr.rel (%p173) target = $region24
      $region23: #{vanilla_attention_forward.2} parent=5 // pred_region
        // Predicated region
        $region25: #{vanilla_attention_forward.2} parent=23 // pred_check
          %p176 = pneg %p56
        $region26: #{vanilla_attention_forward.2} parent=23 // pred_check_branch
          %178 = sbr.rel (%p176) target = $region28
        $region27: #{vanilla_attention_forward.2} parent=23 // pred_region
          %s179 = sand.u32 %s46, 1
          %s180 = scalar_lea.sflag [#allocation4], %s179
          %s181 = sand.u32 %s46, 1
          %s182 = smul.addr %s181, 8
          %s183 = scalar_lea.vmem [#allocation3], %s182
          %185 = vsyncadd %s180, 0
          %s186 = sadd.s32 %s22, %s21
          %s187 = sadd.s32 %s186, %s20
          %s188 = smul.addr %s187, 8
          %s189 = scalar_lea.hbm %s0, %s188
          %s191 = sshll.u32 %s189, 4
          %s192 = int_to_ptr.hbm [resolvable:$true] %s191
          %s193 = sshll.u32 %s183, 4
          %s194 = int_to_ptr.vmem [resolvable:$true] %s193
          %196 = dma.hbm_to_vmem [thread:$0]  %s192, 128, %s194, %s180
        $region28: #{vanilla_attention_forward.2} parent=23 // pred_fallthru
          _
      $region24: #{vanilla_attention_forward.2} parent=5 // pred_fallthru
        _
      %p197 = scmp.le.s32.totalorder 1, %s13
      %p198 = scmp.lt.s32.totalorder %s13, 3
      %p199 = pnand %p197, %p198
      %p200 = pneg %p199
      // Predicated region
      $region29: #{vanilla_attention_forward.2} parent=5 // pred_check
        _
      $region30: #{vanilla_attention_forward.2} parent=5 // pred_check_branch
        %202 = sbr.rel (%p199) target = $region32
      $region31: #{vanilla_attention_forward.2} parent=5 // pred_region
        %s203 = ssub.s32 %s13, 1
        %s204 = sand.u32 %s49, 1
        %s205 = scalar_lea.sflag [#allocation4], %s204
        %s206 = sand.u32 %s49, 1
        %s207 = smul.addr %s206, 8
        %s208 = scalar_lea.vmem [#allocation3], %s207
        // Predicated region
        $region33: #{vanilla_attention_forward.2} parent=31 // pred_check
          %p209 = pneg %p62
        $region34: #{vanilla_attention_forward.2} parent=31 // pred_check_branch
          %211 = sbr.rel (%p209) target = $region36
        $region35: #{vanilla_attention_forward.2} parent=31 // pred_region
          %213 = dma.done %s205, 128
        $region36: #{vanilla_attention_forward.2} parent=31 // pred_fallthru
          _
        // Predicated region
        $region37: #{vanilla_attention_forward.2} parent=31 // pred_check
          %p214 = pneg %p88
        $region38: #{vanilla_attention_forward.2} parent=31 // pred_check_branch
          %216 = sbr.rel (%p214) target = $region40
        $region39: #{vanilla_attention_forward.2} parent=31 // pred_region
          %218 = dma.done [#allocation6], 512
        $region40: #{vanilla_attention_forward.2} parent=31 // pred_fallthru
          _
        %s219 = sand.u32 %s49, 1
        %s220 = scalar_lea.sflag [#allocation4], %s219
        %s221 = sand.u32 %s49, 1
        %s222 = smul.addr %s221, 8
        %s223 = scalar_lea.vmem [#allocation3], %s222
        %p224 = pneg %p62
        %p225 = pneg %p59
        %p226 = pneg %p88
        %p227 = pneg %p85
        %p228 = pneg %p109
        %p229 = pneg %p106
        %p230 = pneg %p137
        %p231 = pneg %p134
        %p232 = scmp.lt.s32.totalorder %s23, 1
        %s233 = scalar_select %p232, %s23, 1
        %p234 = scmp.lt.s32.totalorder %s24, 0
        %s235 = scalar_select %p234, %s24, 0
        %s236 = smul.addr %s233, 4
        %s237 = sadd.s32 %s235, %s236
        %s238 = smul.addr %s237, 8
        %s239 = scalar_lea.vmem %s3, %s238
        %s240 = smul.u32 4, %s25
        %p241 = scmp.lt.s32.totalorder %s23, 1
        %s242 = scalar_select %p241, %s23, 1
        %p243 = scmp.lt.s32.totalorder %s24, 0
        %s244 = scalar_select %p243, %s24, 0
        %s245 = smul.addr %s242, 4
        %s246 = sadd.s32 %s244, %s245
        %s247 = smul.addr %s246, 8
        %s248 = scalar_lea.vmem %s3, %s247
        %p249 = scmp.eq.s32.totalorder %s25, 0
        // Predicated region
        $region41: #{vanilla_attention_forward.2} parent=31 // pred_check
          %p250 = pneg %p249
        $region42: #{vanilla_attention_forward.2} parent=31 // pred_check_branch
          %252 = sbr.rel (%p250) target = $region44
        $region43: #{vanilla_attention_forward.2} parent=31 // pred_region
          %vm253 = vcmask 785408
          %254 = vst.msk [vmem:[#allocation2] sm:$0xff] %vm253, 0.0
        $region44: #{vanilla_attention_forward.2} parent=31 // pred_fallthru
          _
        %v255 = vld [vmem:[#allocation2] sm:$0xff]
        %v256 = vld [vmem:[%s208] sm:$0xff]
        %v257 = vld [vmem:[#allocation5] sm:$0xff]
        %v258 = vld [vmem:[#allocation5 + $0x8] sm:$0xff]
        %v259 = vld [vmem:[#allocation5 + $0x10] sm:$0xff]
        %v260 = vld [vmem:[#allocation5 + $0x18] sm:$0xff]
        %vm261 = vcmask 261120
        %v263 = vsel %vm261, %v256, 0
        %265 = vmatpush.msra.mxu0 0.0
        %266 = vmatpush.msra.mxu0 0.0
        %267 = vmatpush.msra.mxu0 0.0
        %268 = vmatpush.msra.mxu0 0.0
        %269 = vmatpush.msra.mxu0 0.0
        %270 = vmatpush.msra.mxu0 0.0
        %271 = vmatpush.msra.mxu0 0.0
        %272 = vmatpush.msra.mxu0 0.0
        %273 = vmatpush.msra.mxu0 0.0
        %274 = vmatpush.msra.mxu0 0.0
        %275 = vmatpush.msra.mxu0 0.0
        %276 = vmatpush.msra.mxu0 0.0
        %277 = vmatpush.msra.mxu0 %v260
        %278 = vmatpush.msra.mxu0 %v259
        %279 = vmatpush.msra.mxu0 %v258
        %280 = vmatpush.msra.mxu0 %v257
        %281 = vmatmul.f32.gmra.mxu0 %v263
        %v282 = vpop.f32.mrf.mxu0
        %v283 = vadd.f32 0.0, %v282
        %284 = vdwg.mxu0
        %v285 = vadd.f32 %v255, %v283
        %vm286 = vcmask 785408
        %287 = vst.msk [vmem:[#allocation2] sm:$0xff] %vm286, %v285
        // Predicated region
        $region45: #{vanilla_attention_forward.2} parent=31 // pred_check
          %p288 = pneg %p249
        $region46: #{vanilla_attention_forward.2} parent=31 // pred_check_branch
          %290 = sbr.rel (%p288) target = $region48
        $region47: #{vanilla_attention_forward.2} parent=31 // pred_region
          %v291 = vld [vmem:[#allocation2] sm:$0xff]
          %v292 = vld [vmem:[%s2] sm:$0x1]
          %v294 = vperm.slane %v292, 0
          %v296 = vadd.f32 %v291, %v294
          %298 = vrot.lane.b32.xlu0 %v296, 96
          %v299 = vpop.permute.xlu0 %298
          %v301 = vmul.f32 %v296, %v299
          %vm302 = vcmask 64512
          %v303 = vsel %vm302, %v301, 0.0
          %304 = vadd.xlane.f32.xlu0 %v303
          %v305 = vpop.xlane.xlu0 %304
          %306 = vrot.lane.b32.xlu0 %v296, 88
          %v307 = vpop.permute.xlu0 %306
          %v309 = vmul.f32 %v296, %v307
          %v310 = vsel %vm302, %v309, 0.0
          %311 = vadd.xlane.f32.xlu0 %v310
          %v312 = vpop.xlane.xlu0 %311
          %313 = vrot.lane.b32.xlu0 %v296, 80
          %v314 = vpop.permute.xlu0 %313
          %v316 = vmul.f32 %v296, %v314
          %v317 = vsel %vm302, %v316, 0.0
          %318 = vadd.xlane.f32.xlu0 %v317
          %v319 = vpop.xlane.xlu0 %318
          %320 = vrot.lane.b32.xlu0 %v296, 72
          %v321 = vpop.permute.xlu0 %320
          %v323 = vmul.f32 %v296, %v321
          %v324 = vsel %vm302, %v323, 0.0
          %325 = vadd.xlane.f32.xlu0 %v324
          %v326 = vpop.xlane.xlu0 %325
          %vm327 = vcmask 7168
          %v328 = vsel %vm327, %v305, %v312
          %vm329 = vcmask 15360
          %v330 = vsel %vm329, %v328, %v319
          %vm331 = vcmask 23552
          %v332 = vsel %vm331, %v330, %v326
          %v333 = vmul.f32 %v332, 0.35355338
          %vm334 = vcmask 31744
          %v335 = vsel %vm334, %v333, -inf
          %336 = vmax.xlane.f32.xlu0 %v335
          %v337 = vpop.xlane.xlu0 %336
          %v338 = vsub.f32 %v333, %v337
          %v339 = vmul.f32 %v338, 1.442695
          %v340 = vpow.pop %v339
          %v341 = vsel %vm334, %v340, 0.0
          %342 = vadd.xlane.f32.xlu0 %v341
          %v343 = vpop.xlane.xlu0 %342
          %v344 = vrcp.pop %v343
          %v345 = vmul.f32 %v343, %v344
          %v346 = vsub.f32 1.0, %v345
          %v347 = vmul.f32 %v344, %v346
          %v348 = vadd.f32 %v344, %v347
          %vm349 = vweird.f32 %v343
          %vm350 = vweird.f32 %v344
          %vm351 = vmor %vm349, %vm350
          %v352 = vsel %vm351, %v344, %v348
          %v353 = vand.u32 2147483647, %v343
          %vm354 = vcmp.eq.f32.partialorder %v353, 8.507059e+37
          %v355 = vand.u32 %v343, 2147483648
          %v356 = vor.u32 1.1754944e-38, %v355
          %v357 = vsel %vm354, %v356, %v352
          %v358 = vmul.f32 %v340, %v357
          %360 = vset.pattern.permute.xlu0 0
          %361 = vperm.xlu0 %360, %v358
          %v362 = vpop.permute.xlu0 %361
          %v364 = vmul.f32 %v362, %v296
          %365 = vset.pattern.permute.xlu0 1
          %366 = vperm.xlu0 %365, %v358
          %v367 = vpop.permute.xlu0 %366
          %v369 = vmul.f32 %v367, %v296
          %371 = vrot.lane.b32.xlu0 %v369, 120
          %v372 = vpop.permute.xlu0 %371
          %v374 = vadd.f32 %v364, %v372
          %375 = vset.pattern.permute.xlu0 2
          %376 = vperm.xlu0 %375, %v358
          %v377 = vpop.permute.xlu0 %376
          %v379 = vmul.f32 %v377, %v296
          %381 = vrot.lane.b32.xlu0 %v379, 112
          %v382 = vpop.permute.xlu0 %381
          %v384 = vadd.f32 %v374, %v382
          %385 = vset.pattern.permute.xlu0 3
          %386 = vperm.xlu0 %385, %v358
          %v387 = vpop.permute.xlu0 %386
          %v389 = vmul.f32 %v387, %v296
          %391 = vrot.lane.b32.xlu0 %v389, 104
          %v392 = vpop.permute.xlu0 %391
          %v394 = vadd.f32 %v384, %v392
          %395 = vrot.lane.b32.xlu0 %v296, 104
          %v396 = vpop.permute.xlu0 %395
          %v398 = vmul.f32 %v296, %v396
          %400 = vrot.lane.b32.xlu0 %v398, 120
          %v401 = vpop.permute.xlu0 %400
          %v403 = vsel %vm302, %v401, 0.0
          %404 = vadd.xlane.f32.xlu0 %v403
          %v405 = vpop.xlane.xlu0 %404
          %407 = vrot.lane.b32.xlu0 %v301, 120
          %v408 = vpop.permute.xlu0 %407
          %v410 = vsel %vm302, %v408, 0.0
          %411 = vadd.xlane.f32.xlu0 %v410
          %v412 = vpop.xlane.xlu0 %411
          %414 = vrot.lane.b32.xlu0 %v309, 120
          %v415 = vpop.permute.xlu0 %414
          %v417 = vsel %vm302, %v415, 0.0
          %418 = vadd.xlane.f32.xlu0 %v417
          %v419 = vpop.xlane.xlu0 %418
          %421 = vrot.lane.b32.xlu0 %v316, 120
          %v422 = vpop.permute.xlu0 %421
          %v424 = vsel %vm302, %v422, 0.0
          %425 = vadd.xlane.f32.xlu0 %v424
          %v426 = vpop.xlane.xlu0 %425
          %v427 = vsel %vm327, %v405, %v412
          %v428 = vsel %vm329, %v427, %v419
          %v429 = vsel %vm331, %v428, %v426
          %v430 = vmul.f32 %v429, 0.35355338
          %v431 = vsel %vm334, %v430, -inf
          %432 = vmax.xlane.f32.xlu0 %v431
          %v433 = vpop.xlane.xlu0 %432
          %v434 = vsub.f32 %v430, %v433
          %v435 = vmul.f32 %v434, 1.442695
          %v436 = vpow.pop %v435
          %v437 = vsel %vm334, %v436, 0.0
          %438 = vadd.xlane.f32.xlu0 %v437
          %v439 = vpop.xlane.xlu0 %438
          %v440 = vrcp.pop %v439
          %v441 = vmul.f32 %v439, %v440
          %v442 = vsub.f32 1.0, %v441
          %v443 = vmul.f32 %v440, %v442
          %v444 = vadd.f32 %v440, %v443
          %vm445 = vweird.f32 %v439
          %vm446 = vweird.f32 %v440
          %vm447 = vmor %vm445, %vm446
          %v448 = vsel %vm447, %v440, %v444
          %v449 = vand.u32 2147483647, %v439
          %vm450 = vcmp.eq.f32.partialorder %v449, 8.507059e+37
          %v451 = vand.u32 %v439, 2147483648
          %v452 = vor.u32 1.1754944e-38, %v451
          %v453 = vsel %vm450, %v452, %v448
          %v454 = vmul.f32 %v436, %v453
          %456 = vset.pattern.permute.xlu0 0
          %457 = vperm.xlu0 %456, %v454
          %v458 = vpop.permute.xlu0 %457
          %v460 = vmul.f32 %v458, %v296
          %461 = vset.pattern.permute.xlu0 1
          %462 = vperm.xlu0 %461, %v454
          %v463 = vpop.permute.xlu0 %462
          %v465 = vmul.f32 %v463, %v296
          %467 = vrot.lane.b32.xlu0 %v465, 120
          %v468 = vpop.permute.xlu0 %467
          %v470 = vadd.f32 %v460, %v468
          %471 = vset.pattern.permute.xlu0 2
          %472 = vperm.xlu0 %471, %v454
          %v473 = vpop.permute.xlu0 %472
          %v475 = vmul.f32 %v473, %v296
          %477 = vrot.lane.b32.xlu0 %v475, 112
          %v478 = vpop.permute.xlu0 %477
          %v480 = vadd.f32 %v470, %v478
          %481 = vset.pattern.permute.xlu0 3
          %482 = vperm.xlu0 %481, %v454
          %v483 = vpop.permute.xlu0 %482
          %v485 = vmul.f32 %v483, %v296
          %487 = vrot.lane.b32.xlu0 %v485, 104
          %v488 = vpop.permute.xlu0 %487
          %v490 = vadd.f32 %v480, %v488
          %491 = vrot.lane.b32.xlu0 %v296, 112
          %v492 = vpop.permute.xlu0 %491
          %v494 = vmul.f32 %v296, %v492
          %496 = vrot.lane.b32.xlu0 %v494, 112
          %v497 = vpop.permute.xlu0 %496
          %v499 = vsel %vm302, %v497, 0.0
          %500 = vadd.xlane.f32.xlu0 %v499
          %v501 = vpop.xlane.xlu0 %500
          %502 = vrot.lane.b32.xlu0 %v398, 112
          %v503 = vpop.permute.xlu0 %502
          %v505 = vsel %vm302, %v503, 0.0
          %506 = vadd.xlane.f32.xlu0 %v505
          %v507 = vpop.xlane.xlu0 %506
          %508 = vrot.lane.b32.xlu0 %v301, 112
          %v509 = vpop.permute.xlu0 %508
          %v511 = vsel %vm302, %v509, 0.0
          %512 = vadd.xlane.f32.xlu0 %v511
          %v513 = vpop.xlane.xlu0 %512
          %514 = vrot.lane.b32.xlu0 %v309, 112
          %v515 = vpop.permute.xlu0 %514
          %v517 = vsel %vm302, %v515, 0.0
          %518 = vadd.xlane.f32.xlu0 %v517
          %v519 = vpop.xlane.xlu0 %518
          %v520 = vsel %vm327, %v501, %v507
          %v521 = vsel %vm329, %v520, %v513
          %v522 = vsel %vm331, %v521, %v519
          %v523 = vmul.f32 %v522, 0.35355338
          %v524 = vsel %vm334, %v523, -inf
          %525 = vmax.xlane.f32.xlu0 %v524
          %v526 = vpop.xlane.xlu0 %525
          %v527 = vsub.f32 %v523, %v526
          %v528 = vmul.f32 %v527, 1.442695
          %v529 = vpow.pop %v528
          %v530 = vsel %vm334, %v529, 0.0
          %531 = vadd.xlane.f32.xlu0 %v530
          %v532 = vpop.xlane.xlu0 %531
          %v533 = vrcp.pop %v532
          %v534 = vmul.f32 %v532, %v533
          %v535 = vsub.f32 1.0, %v534
          %v536 = vmul.f32 %v533, %v535
          %v537 = vadd.f32 %v533, %v536
          %vm538 = vweird.f32 %v532
          %vm539 = vweird.f32 %v533
          %vm540 = vmor %vm538, %vm539
          %v541 = vsel %vm540, %v533, %v537
          %v542 = vand.u32 2147483647, %v532
          %vm543 = vcmp.eq.f32.partialorder %v542, 8.507059e+37
          %v544 = vand.u32 %v532, 2147483648
          %v545 = vor.u32 1.1754944e-38, %v544
          %v546 = vsel %vm543, %v545, %v541
          %v547 = vmul.f32 %v529, %v546
          %549 = vset.pattern.permute.xlu0 0
          %550 = vperm.xlu0 %549, %v547
          %v551 = vpop.permute.xlu0 %550
          %v553 = vmul.f32 %v551, %v296
          %554 = vset.pattern.permute.xlu0 1
          %555 = vperm.xlu0 %554, %v547
          %v556 = vpop.permute.xlu0 %555
          %v558 = vmul.f32 %v556, %v296
          %560 = vrot.lane.b32.xlu0 %v558, 120
          %v561 = vpop.permute.xlu0 %560
          %v563 = vadd.f32 %v553, %v561
          %564 = vset.pattern.permute.xlu0 2
          %565 = vperm.xlu0 %564, %v547
          %v566 = vpop.permute.xlu0 %565
          %v568 = vmul.f32 %v566, %v296
          %570 = vrot.lane.b32.xlu0 %v568, 112
          %v571 = vpop.permute.xlu0 %570
          %v573 = vadd.f32 %v563, %v571
          %574 = vset.pattern.permute.xlu0 3
          %575 = vperm.xlu0 %574, %v547
          %v576 = vpop.permute.xlu0 %575
          %v578 = vmul.f32 %v576, %v296
          %580 = vrot.lane.b32.xlu0 %v578, 104
          %v581 = vpop.permute.xlu0 %580
          %v583 = vadd.f32 %v573, %v581
          %584 = vrot.lane.b32.xlu0 %v296, 120
          %v585 = vpop.permute.xlu0 %584
          %v587 = vmul.f32 %v296, %v585
          %589 = vrot.lane.b32.xlu0 %v587, 104
          %v590 = vpop.permute.xlu0 %589
          %v592 = vsel %vm302, %v590, 0.0
          %593 = vadd.xlane.f32.xlu0 %v592
          %v594 = vpop.xlane.xlu0 %593
          %595 = vrot.lane.b32.xlu0 %v494, 104
          %v596 = vpop.permute.xlu0 %595
          %v598 = vsel %vm302, %v596, 0.0
          %599 = vadd.xlane.f32.xlu0 %v598
          %v600 = vpop.xlane.xlu0 %599
          %601 = vrot.lane.b32.xlu0 %v398, 104
          %v602 = vpop.permute.xlu0 %601
          %v604 = vsel %vm302, %v602, 0.0
          %605 = vadd.xlane.f32.xlu0 %v604
          %v606 = vpop.xlane.xlu0 %605
          %607 = vrot.lane.b32.xlu0 %v301, 104
          %v608 = vpop.permute.xlu0 %607
          %v610 = vsel %vm302, %v608, 0.0
          %611 = vadd.xlane.f32.xlu0 %v610
          %v612 = vpop.xlane.xlu0 %611
          %v613 = vsel %vm327, %v594, %v600
          %v614 = vsel %vm329, %v613, %v606
          %v615 = vsel %vm331, %v614, %v612
          %v616 = vmul.f32 %v615, 0.35355338
          %v617 = vsel %vm334, %v616, -inf
          %618 = vmax.xlane.f32.xlu0 %v617
          %v619 = vpop.xlane.xlu0 %618
          %v620 = vsub.f32 %v616, %v619
          %v621 = vmul.f32 %v620, 1.442695
          %v622 = vpow.pop %v621
          %v623 = vsel %vm334, %v622, 0.0
          %624 = vadd.xlane.f32.xlu0 %v623
          %v625 = vpop.xlane.xlu0 %624
          %v626 = vrcp.pop %v625
          %v627 = vmul.f32 %v625, %v626
          %v628 = vsub.f32 1.0, %v627
          %v629 = vmul.f32 %v626, %v628
          %v630 = vadd.f32 %v626, %v629
          %vm631 = vweird.f32 %v625
          %vm632 = vweird.f32 %v626
          %vm633 = vmor %vm631, %vm632
          %v634 = vsel %vm633, %v626, %v630
          %v635 = vand.u32 2147483647, %v625
          %vm636 = vcmp.eq.f32.partialorder %v635, 8.507059e+37
          %v637 = vand.u32 %v625, 2147483648
          %v638 = vor.u32 1.1754944e-38, %v637
          %v639 = vsel %vm636, %v638, %v634
          %v640 = vmul.f32 %v622, %v639
          %642 = vset.pattern.permute.xlu0 0
          %643 = vperm.xlu0 %642, %v640
          %v644 = vpop.permute.xlu0 %643
          %v646 = vmul.f32 %v644, %v296
          %647 = vset.pattern.permute.xlu0 1
          %648 = vperm.xlu0 %647, %v640
          %v649 = vpop.permute.xlu0 %648
          %v651 = vmul.f32 %v649, %v296
          %653 = vrot.lane.b32.xlu0 %v651, 120
          %v654 = vpop.permute.xlu0 %653
          %v656 = vadd.f32 %v646, %v654
          %657 = vset.pattern.permute.xlu0 2
          %658 = vperm.xlu0 %657, %v640
          %v659 = vpop.permute.xlu0 %658
          %v661 = vmul.f32 %v659, %v296
          %663 = vrot.lane.b32.xlu0 %v661, 112
          %v664 = vpop.permute.xlu0 %663
          %v666 = vadd.f32 %v656, %v664
          %667 = vset.pattern.permute.xlu0 3
          %668 = vperm.xlu0 %667, %v640
          %v669 = vpop.permute.xlu0 %668
          %v671 = vmul.f32 %v669, %v296
          %673 = vrot.lane.b32.xlu0 %v671, 104
          %v674 = vpop.permute.xlu0 %673
          %v676 = vadd.f32 %v666, %v674
          %681 = vrot.lane.b32.xlu0 %v394, 64
          %v682 = vpop.permute.xlu0 %681
          %683 = vrot.lane.b32.xlu0 %v490, 64
          %v684 = vpop.permute.xlu0 %683
          %685 = vrot.lane.b32.xlu0 %v583, 64
          %v686 = vpop.permute.xlu0 %685
          %687 = vrot.lane.b32.xlu0 %v676, 64
          %v688 = vpop.permute.xlu0 %687
          %693 = vst.msk [vmem:[%s248] sm:$0xff] %vm302, %v682
          %694 = vst.msk [vmem:[%s248 + $0x8] sm:$0xff] %vm302, %v684
          %695 = vst.msk [vmem:[%s248 + $0x10] sm:$0xff] %vm302, %v686
          %696 = vst.msk [vmem:[%s248 + $0x18] sm:$0xff] %vm302, %v688
        $region48: #{vanilla_attention_forward.2} parent=31 // pred_fallthru
          _
        %p697 = scmp.lt.s32.totalorder %s23, 1
        %s698 = scalar_select %p697, %s23, 1
        %p699 = scmp.lt.s32.totalorder %s24, 0
        %s700 = scalar_select %p699, %s24, 0
        %s701 = smul.addr %s698, 4
        %s702 = sadd.s32 %s700, %s701
        %s703 = smul.addr %s702, 8
        %s704 = scalar_lea.vmem %s3, %s703
        // Predicated region
        $region49: #{vanilla_attention_forward.2} parent=31 // pred_check
          %p705 = pneg %p134
        $region50: #{vanilla_attention_forward.2} parent=31 // pred_check_branch
          %707 = sbr.rel (%p705) target = $region52
        $region51: #{vanilla_attention_forward.2} parent=31 // pred_region
          _
        $region52: #{vanilla_attention_forward.2} parent=31 // pred_fallthru
          _
      $region32: #{vanilla_attention_forward.2} parent=5 // pred_fallthru
        _
      %p708 = scmp.le.s32.totalorder 2, %s13
      // Predicated region
      $region53: #{vanilla_attention_forward.2} parent=5 // pred_check
        %p709 = pneg %p708
      $region54: #{vanilla_attention_forward.2} parent=5 // pred_check_branch
        %711 = sbr.rel (%p709) target = $region56
      $region55: #{vanilla_attention_forward.2} parent=5 // pred_region
        %s712 = ssub.s32 %s13, 2
        // Predicated region
        $region57: #{vanilla_attention_forward.2} parent=55 // pred_check
          %p713 = pneg %p140
        $region58: #{vanilla_attention_forward.2} parent=55 // pred_check_branch
          %715 = sbr.rel (%p713) target = $region60
        $region59: #{vanilla_attention_forward.2} parent=55 // pred_region
          %p716 = scmp.lt.s32.totalorder %s26, 1
          %s717 = scalar_select %p716, %s26, 1
          %p718 = scmp.lt.s32.totalorder %s27, 0
          %s719 = scalar_select %p718, %s27, 0
          %s720 = smul.addr %s717, 4
          %s721 = sadd.s32 %s719, %s720
          %s722 = smul.addr %s721, 8
          %s723 = scalar_lea.vmem %s3, %s722
        $region60: #{vanilla_attention_forward.2} parent=55 // pred_fallthru
          _
      $region56: #{vanilla_attention_forward.2} parent=5 // pred_fallthru
        _
    $region6: #{vanilla_attention_forward.2} parent=1 // loop_footer
      %s17 = sadd.s32 1, %s13
    $region7: #{vanilla_attention_forward.2} parent=1 // loop_footer_branch
      %12 = sbr.rel target = $region3
    $region8: #{vanilla_attention_forward.2} parent=1 // loop_exit
      _
    %724 = vsyncpa [#allocation4], 1
    %s725 = scalar_lea.sflag [#allocation4], 1
    %726 = vsyncpa %s725, 1
    %727 = vsyncpa [#allocation6], 1

</llo_original>
